<compile_context>
chip_gen: v6e
topology: v6e:2x2x1
jax: 0.10.0
libtpu: 0.0.40
codegen_flags: <defaults>
</compile_context>

<pallas_src>
import math

import jax
import jax.numpy as jnp
from jax.experimental import pallas as pl
from jax.experimental.pallas import tpu as pltpu

# ---------------------------------------------------------------------------
# Config (small, deterministic synthetic model)
# ---------------------------------------------------------------------------
VOCAB = 32     # vocab size
H = 128        # hidden size
S = 8          # sequence length
B = 2          # batch
NH = 2         # attention heads
DH = H // NH   # head dim = 64
FFN = 256      # feed-forward inner dim
NCLS = 8       # number of classes
LANE = 128     # lane-padded classifier width
LN_EPS = 1e-12


# ---------------------------------------------------------------------------
# In-kernel helpers
# ---------------------------------------------------------------------------
def _layernorm(x, g, b):
    # f32 statistics
    mean = jnp.mean(x, axis=-1, keepdims=True)
    cent = x - mean
    var = jnp.mean(cent * cent, axis=-1, keepdims=True)
    return cent * jax.lax.rsqrt(var + LN_EPS) * g + b


def _mm(x, w_ref, b_ref):
    # bf16 MXU operands, f32 accumulation, f32 bias add
    return jnp.dot(x.astype(jnp.bfloat16), w_ref[...],
                   preferred_element_type=jnp.float32) + b_ref[...]


# ---------------------------------------------------------------------------
# Single fused kernel: one grid step == one sequence
# ---------------------------------------------------------------------------
def _fused_encoder_kernel(
    x_ref,            # (S, H)   f32   tok + pos embeddings of this sequence
    bias_ref,         # (1, S)   f32   additive attention-mask bias (0 / -1e9)
    ln_emb_g_ref, ln_emb_b_ref,        # (1, H) f32
    wqkv_ref, bqkv_ref,                # (H, 3H) bf16, (1, 3H) f32
    wo_ref, bo_ref,                    # (H, H)  bf16, (1, H)  f32
    ln1_g_ref, ln1_b_ref,              # (1, H)  f32
    w1_ref, b1_ref,                    # (H, FFN) bf16, (1, FFN) f32
    w2_ref, b2_ref,                    # (FFN, H) bf16, (1, H)   f32
    ln2_g_ref, ln2_b_ref,              # (1, H)  f32
    wp_ref, bp_ref,                    # (H, H)  bf16, (1, H)  f32 (pooler)
    wc_ref, bc_ref,                    # (H, LANE) bf16, (1, LANE) f32 (classifier, lane-padded)
    o_ref,                             # (1, LANE) f32
):
    # ---- embedding LayerNorm (no residual / no zeros input) ----
    x = _layernorm(x_ref[...], ln_emb_g_ref[...], ln_emb_b_ref[...])      # (S, H) f32

    # ---- fused QKV projection (one MXU pass, lane-dense N = 3H) ----
    qkv = _mm(x, wqkv_ref, bqkv_ref)                                      # (S, 3H) f32
    q = qkv[:, 0 * H:1 * H]                                               # lane-tile aligned splits
    k = qkv[:, 1 * H:2 * H]
    v = qkv[:, 2 * H:3 * H]

    bias = bias_ref[...]                                                  # (1, S)
    scale = 1.0 / math.sqrt(DH)

    # ---- multi-head attention: heads isolated via lane masks ----
    lane = jax.lax.broadcasted_iota(jnp.int32, (S, H), 1)
    ctx = jnp.zeros((S, H), jnp.float32)
    for h in range(NH):                                                   # NH=2, unrolled
        hmask = ((lane >= h * DH) & (lane < (h + 1) * DH)).astype(jnp.float32)
        qh = (q * hmask).astype(jnp.bfloat16)                             # zero other head's lanes
        s = jax.lax.dot_general(qh, k.astype(jnp.bfloat16),
                                (((1,), (1,)), ((), ())),
                                preferred_element_type=jnp.float32)       # (S, S) == q_h @ k_h^T
        s = s * scale + bias
        s = s - jnp.max(s, axis=-1, keepdims=True)
        p = jnp.exp(s)
        p = p * pl.reciprocal(jnp.sum(p, axis=-1, keepdims=True), approx=True)
        ph = jnp.dot(p.astype(jnp.bfloat16), v.astype(jnp.bfloat16),
                     preferred_element_type=jnp.float32)                  # (S, H)
        ctx = ctx + ph * hmask                                            # keep only head-h lanes

    # ---- attention output projection + residual LayerNorm ----
    attn_out = _mm(ctx, wo_ref, bo_ref)
    x1 = _layernorm(attn_out + x, ln1_g_ref[...], ln1_b_ref[...])

    # ---- feed-forward block ----
    hdn = _mm(x1, w1_ref, b1_ref)
    # TODO(synk): PyTorch nn.GELU default is the erf form; tanh approximation used here.
    hdn = 0.5 * hdn * (1.0 + jnp.tanh(0.7978845608028654 *
                                      (hdn + 0.044715 * hdn * hdn * hdn)))
    ff = _mm(hdn, w2_ref, b2_ref)
    x2 = _layernorm(ff + x1, ln2_g_ref[...], ln2_b_ref[...])

    # ---- pooler ([CLS] token, dense + tanh) + classifier (lane-dense output) ----
    cls = x2[0:1, :]                                                      # (1, H)
    pooled = jnp.tanh(_mm(cls, wp_ref, bp_ref))                           # (1, H)
    o_ref[...] = _mm(pooled, wc_ref, bc_ref)                              # (1, LANE)


# ---------------------------------------------------------------------------
# Parameter initialization (deterministic, synthetic)
# ---------------------------------------------------------------------------
def init_params(key):
    ks = jax.random.split(key, 16)
    n = lambda k, shape: 0.02 * jax.random.normal(k, shape, dtype=jnp.float32)
    return {
        "tok_emb": n(ks[0], (VOCAB, H)),
        "pos_emb": n(ks[1], (S, H)),
        "ln_emb_g": jnp.ones((H,), jnp.float32),
        "ln_emb_b": jnp.zeros((H,), jnp.float32),
        "wq": n(ks[2], (H, H)), "bq": jnp.zeros((H,), jnp.float32),
        "wk": n(ks[3], (H, H)), "bk": jnp.zeros((H,), jnp.float32),
        "wv": n(ks[4], (H, H)), "bv": jnp.zeros((H,), jnp.float32),
        "wo": n(ks[5], (H, H)), "bo": jnp.zeros((H,), jnp.float32),
        "ln1_g": jnp.ones((H,), jnp.float32),
        "ln1_b": jnp.zeros((H,), jnp.float32),
        "w1": n(ks[6], (H, FFN)), "b1": jnp.zeros((FFN,), jnp.float32),
        "w2": n(ks[7], (FFN, H)), "b2": jnp.zeros((H,), jnp.float32),
        "ln2_g": jnp.ones((H,), jnp.float32),
        "ln2_b": jnp.zeros((H,), jnp.float32),
        "wp": n(ks[8], (H, H)), "bp": jnp.zeros((H,), jnp.float32),            # pooler
        "wc": n(ks[9], (H, NCLS)), "bc": jnp.zeros((NCLS,), jnp.float32),      # classifier fc
    }


def _full_spec(shape):
    # Whole-array block, same block for every grid step (weights stay resident in VMEM).
    return pl.BlockSpec(shape, lambda b: (0,) * len(shape))


# ---------------------------------------------------------------------------
# ClassifierNet.forward: bert(input_ids, attention_mask) -> pooled -> fc -> logits
# ---------------------------------------------------------------------------
def classifier_net_forward(params, input_ids, attention_mask):
    Bb, Ss = input_ids.shape
    assert Ss == S

    # --- embedding gather + positional add (glue, single fused XLA op) ---
    tok = jnp.take(params["tok_emb"], input_ids, axis=0)                   # (B, S, H)
    pos = params["pos_emb"][None, :Ss, :]                                  # (1, S, H)
    x = (tok + pos).astype(jnp.float32)                                    # (B, S, H)

    # --- additive attention-mask bias: 0 attended / -1e9 padded, shape (B, 1, S) ---
    bias = ((1.0 - attention_mask.astype(jnp.float32)) * -1e9)[:, None, :]

    to_bf16 = lambda w: w.astype(jnp.bfloat16)
    row = lambda v: v.reshape(1, -1).astype(jnp.float32)

    # Fused QKV weights; classifier padded to lane-dense (H, 128).
    wqkv = to_bf16(jnp.concatenate([params["wq"], params["wk"], params["wv"]], axis=1))
    bqkv = row(jnp.concatenate([params["bq"], params["bk"], params["bv"]]))
    wc_pad = jnp.zeros((H, LANE), jnp.float32).at[:, :NCLS].set(params["wc"])
    bc_pad = jnp.zeros((1, LANE), jnp.float32).at[0, :NCLS].set(params["bc"])

    inputs = (
        x, bias,
        row(params["ln_emb_g"]), row(params["ln_emb_b"]),
        wqkv, bqkv,
        to_bf16(params["wo"]), row(params["bo"]),
        row(params["ln1_g"]), row(params["ln1_b"]),
        to_bf16(params["w1"]), row(params["b1"]),
        to_bf16(params["w2"]), row(params["b2"]),
        row(params["ln2_g"]), row(params["ln2_b"]),
        to_bf16(params["wp"]), row(params["bp"]),
        to_bf16(wc_pad), bc_pad,
    )

    in_specs = [
        pl.BlockSpec((None, S, H), lambda b: (b, 0, 0)),     # per-sequence embeddings
        pl.BlockSpec((None, 1, S), lambda b: (b, 0, 0)),     # per-sequence mask bias
    ] + [_full_spec(a.shape) for a in inputs[2:]]            # weights: whole-array, resident

    out = pl.pallas_call(
        _fused_encoder_kernel,
        out_shape=jax.ShapeDtypeStruct((Bb, 1, LANE), jnp.float32),
        grid=(Bb,),
        in_specs=in_specs,
        out_specs=pl.BlockSpec((None, 1, LANE), lambda b: (b, 0, 0)),
        compiler_params=pltpu.CompilerParams(
            dimension_semantics=("parallel",)),              # v7x: one sequence per TensorCore
    )(*inputs)

    return out[:, 0, :NCLS]                                  # slice lane padding off (glue)


if __name__ == "__main__":
    key = jax.random.PRNGKey(0)
    pkey, ikey = jax.random.split(key)
    params = init_params(pkey)

    input_ids = jax.random.randint(ikey, (B, S), 0, VOCAB, dtype=jnp.int32)
    # mask out the last two tokens of the second sequence (padding)
    attention_mask = jnp.array(
        [[1, 1, 1, 1, 1, 1, 1, 1],
         [1, 1, 1, 1, 1, 1, 0, 0]], dtype=jnp.int32)

    logits = jax.jit(classifier_net_forward)(params, input_ids, attention_mask)
    logits = jax.block_until_ready(logits)
    assert logits.shape == (B, NCLS) and logits.dtype == jnp.float32
    print("KERNEL_OK")
</pallas_src>

<mosaic_0001>
module attributes {stable_mosaic.version = 11 : i64} {
  func.func @_fused_encoder_kernel(%arg0: i32, %arg1: memref<1x8x128xf32, #tpu.memory_space<vmem>>, %arg2: memref<1x1x8xf32, #tpu.memory_space<vmem>>, %arg3: memref<1x128xf32, #tpu.memory_space<vmem>>, %arg4: memref<1x128xf32, #tpu.memory_space<vmem>>, %arg5: memref<128x384xbf16, #tpu.memory_space<vmem>>, %arg6: memref<1x384xf32, #tpu.memory_space<vmem>>, %arg7: memref<128x128xbf16, #tpu.memory_space<vmem>>, %arg8: memref<1x128xf32, #tpu.memory_space<vmem>>, %arg9: memref<1x128xf32, #tpu.memory_space<vmem>>, %arg10: memref<1x128xf32, #tpu.memory_space<vmem>>, %arg11: memref<128x256xbf16, #tpu.memory_space<vmem>>, %arg12: memref<1x256xf32, #tpu.memory_space<vmem>>, %arg13: memref<256x128xbf16, #tpu.memory_space<vmem>>, %arg14: memref<1x128xf32, #tpu.memory_space<vmem>>, %arg15: memref<1x128xf32, #tpu.memory_space<vmem>>, %arg16: memref<1x128xf32, #tpu.memory_space<vmem>>, %arg17: memref<128x128xbf16, #tpu.memory_space<vmem>>, %arg18: memref<1x128xf32, #tpu.memory_space<vmem>>, %arg19: memref<128x128xbf16, #tpu.memory_space<vmem>>, %arg20: memref<1x128xf32, #tpu.memory_space<vmem>>, %arg21: memref<1x1x128xf32, #tpu.memory_space<vmem>>) attributes {dimension_semantics = [#tpu.dimension_semantics<parallel>], iteration_bounds = array<i64: 2>, scalar_prefetch = 0 : i64, scratch_operands = 0 : i64, tpu.core_type = #tpu.core_type<tc>, window_params = [{transform_indices = @transform_0, window_bounds = array<i64: 1, 8, 128>}, {transform_indices = @transform_1, window_bounds = array<i64: 1, 1, 8>}, {pipeline_mode = #tpu.pipeline_mode<synchronous>, transform_indices = @transform_2, window_bounds = array<i64: 1, 128>}, {pipeline_mode = #tpu.pipeline_mode<synchronous>, transform_indices = @transform_3, window_bounds = array<i64: 1, 128>}, {pipeline_mode = #tpu.pipeline_mode<synchronous>, transform_indices = @transform_4, window_bounds = array<i64: 128, 384>}, {pipeline_mode = #tpu.pipeline_mode<synchronous>, transform_indices = @transform_5, window_bounds = array<i64: 1, 384>}, {pipeline_mode = #tpu.pipeline_mode<synchronous>, transform_indices = @transform_6, window_bounds = array<i64: 128, 128>}, {pipeline_mode = #tpu.pipeline_mode<synchronous>, transform_indices = @transform_7, window_bounds = array<i64: 1, 128>}, {pipeline_mode = #tpu.pipeline_mode<synchronous>, transform_indices = @transform_8, window_bounds = array<i64: 1, 128>}, {pipeline_mode = #tpu.pipeline_mode<synchronous>, transform_indices = @transform_9, window_bounds = array<i64: 1, 128>}, {pipeline_mode = #tpu.pipeline_mode<synchronous>, transform_indices = @transform_10, window_bounds = array<i64: 128, 256>}, {pipeline_mode = #tpu.pipeline_mode<synchronous>, transform_indices = @transform_11, window_bounds = array<i64: 1, 256>}, {pipeline_mode = #tpu.pipeline_mode<synchronous>, transform_indices = @transform_12, window_bounds = array<i64: 256, 128>}, {pipeline_mode = #tpu.pipeline_mode<synchronous>, transform_indices = @transform_13, window_bounds = array<i64: 1, 128>}, {pipeline_mode = #tpu.pipeline_mode<synchronous>, transform_indices = @transform_14, window_bounds = array<i64: 1, 128>}, {pipeline_mode = #tpu.pipeline_mode<synchronous>, transform_indices = @transform_15, window_bounds = array<i64: 1, 128>}, {pipeline_mode = #tpu.pipeline_mode<synchronous>, transform_indices = @transform_16, window_bounds = array<i64: 128, 128>}, {pipeline_mode = #tpu.pipeline_mode<synchronous>, transform_indices = @transform_17, window_bounds = array<i64: 1, 128>}, {pipeline_mode = #tpu.pipeline_mode<synchronous>, transform_indices = @transform_18, window_bounds = array<i64: 128, 128>}, {pipeline_mode = #tpu.pipeline_mode<synchronous>, transform_indices = @transform_19, window_bounds = array<i64: 1, 128>}, {transform_indices = @transform_20, window_bounds = array<i64: 1, 1, 128>}]} {
    %c0 = arith.constant 0 : index
    %c0_0 = arith.constant 0 : index
    %c0_1 = arith.constant 0 : index
    %0 = vector.load %arg1[%c0, %c0_0, %c0_1] : memref<1x8x128xf32, #tpu.memory_space<vmem>>, vector<1x8x128xf32>
    %1 = vector.shape_cast %0 : vector<1x8x128xf32> to vector<8x128xf32>
    %c0_2 = arith.constant 0 : index
    %c0_3 = arith.constant 0 : index
    %2 = vector.load %arg3[%c0_2, %c0_3] : memref<1x128xf32, #tpu.memory_space<vmem>>, vector<1x128xf32>
    %c0_4 = arith.constant 0 : index
    %c0_5 = arith.constant 0 : index
    %3 = vector.load %arg4[%c0_4, %c0_5] : memref<1x128xf32, #tpu.memory_space<vmem>>, vector<1x128xf32>
    %cst = arith.constant dense<0.000000e+00> : vector<8xf32>
    %4 = vector.multi_reduction <add>, %1, %cst [1] : vector<8x128xf32> to vector<8xf32>
    %5 = vector.shape_cast %4 : vector<8xf32> to vector<8x1xf32>
    %cst_6 = arith.constant 1.280000e+02 : f32
    %6 = vector.broadcast %cst_6 : f32 to vector<8x1xf32>
    %7 = arith.divf %5, %6 : vector<8x1xf32>
    %8 = vector.broadcast %7 : vector<8x1xf32> to vector<8x128xf32>
    %9 = arith.subf %1, %8 : vector<8x128xf32>
    %10 = arith.mulf %9, %9 : vector<8x128xf32>
    %cst_7 = arith.constant dense<0.000000e+00> : vector<8xf32>
    %11 = vector.multi_reduction <add>, %10, %cst_7 [1] : vector<8x128xf32> to vector<8xf32>
    %12 = vector.shape_cast %11 : vector<8xf32> to vector<8x1xf32>
    %cst_8 = arith.constant 1.280000e+02 : f32
    %13 = vector.broadcast %cst_8 : f32 to vector<8x1xf32>
    %14 = arith.divf %12, %13 : vector<8x1xf32>
    %cst_9 = arith.constant 9.99999996E-13 : f32
    %15 = vector.broadcast %cst_9 : f32 to vector<8x1xf32>
    %16 = arith.addf %14, %15 : vector<8x1xf32>
    %17 = math.rsqrt %16 : vector<8x1xf32>
    %18 = vector.broadcast %17 : vector<8x1xf32> to vector<8x128xf32>
    %19 = arith.mulf %9, %18 : vector<8x128xf32>
    %20 = vector.broadcast %2 : vector<1x128xf32> to vector<8x128xf32>
    %21 = arith.mulf %19, %20 : vector<8x128xf32>
    %22 = vector.broadcast %3 : vector<1x128xf32> to vector<8x128xf32>
    %23 = arith.addf %21, %22 : vector<8x128xf32>
    %24 = arith.truncf %23 : vector<8x128xf32> to vector<8x128xbf16>
    %c0_10 = arith.constant 0 : index
    %c0_11 = arith.constant 0 : index
    %25 = vector.load %arg5[%c0_10, %c0_11] : memref<128x384xbf16, #tpu.memory_space<vmem>>, vector<128x384xbf16>
    %cst_12 = arith.constant dense<0.000000e+00> : vector<8x384xf32>
    %26 = tpu.matmul %24, %25, %cst_12 {dimension_numbers = #tpu.dot_dimension_numbers<[1], [0], [0], [1], [0, 0, 1, 1], [], []>} : vector<8x128xbf16>, vector<128x384xbf16>, vector<8x384xf32> -> vector<8x384xf32>
    %c0_13 = arith.constant 0 : index
    %c0_14 = arith.constant 0 : index
    %27 = vector.load %arg6[%c0_13, %c0_14] : memref<1x384xf32, #tpu.memory_space<vmem>>, vector<1x384xf32>
    %28 = vector.broadcast %27 : vector<1x384xf32> to vector<8x384xf32>
    %29 = arith.addf %26, %28 : vector<8x384xf32>
    %30 = vector.extract_strided_slice %29 {offsets = [0, 0], sizes = [8, 128], strides = [1, 1]} : vector<8x384xf32> to vector<8x128xf32>
    %31 = vector.extract_strided_slice %29 {offsets = [0, 128], sizes = [8, 128], strides = [1, 1]} : vector<8x384xf32> to vector<8x128xf32>
    %32 = vector.extract_strided_slice %29 {offsets = [0, 256], sizes = [8, 128], strides = [1, 1]} : vector<8x384xf32> to vector<8x128xf32>
    %c0_15 = arith.constant 0 : index
    %c0_16 = arith.constant 0 : index
    %c0_17 = arith.constant 0 : index
    %33 = vector.load %arg2[%c0_15, %c0_16, %c0_17] : memref<1x1x8xf32, #tpu.memory_space<vmem>>, vector<1x1x8xf32>
    %34 = vector.shape_cast %33 : vector<1x1x8xf32> to vector<1x8xf32>
    %35 = tpu.iota {dimensions = array<i32: 1>} : vector<8x128xi32>
    %cst_18 = arith.constant 0.000000e+00 : f32
    %36 = vector.broadcast %cst_18 : f32 to vector<8x128xf32>
    %c0_i32 = arith.constant 0 : i32
    %37 = vector.broadcast %c0_i32 : i32 to vector<8x128xi32>
    %38 = arith.cmpi sge, %35, %37 : vector<8x128xi32>
    %c64_i32 = arith.constant 64 : i32
    %39 = vector.broadcast %c64_i32 : i32 to vector<8x128xi32>
    %40 = arith.cmpi slt, %35, %39 : vector<8x128xi32>
    %41 = arith.andi %38, %40 : vector<8x128xi1>
    %42 = arith.extui %41 : vector<8x128xi1> to vector<8x128xi32>
    %43 = arith.sitofp %42 : vector<8x128xi32> to vector<8x128xf32>
    %44 = arith.mulf %30, %43 : vector<8x128xf32>
    %45 = arith.truncf %44 : vector<8x128xf32> to vector<8x128xbf16>
    %46 = arith.truncf %31 : vector<8x128xf32> to vector<8x128xbf16>
    %cst_19 = arith.constant dense<0.000000e+00> : vector<8x8xf32>
    %47 = tpu.matmul %45, %46, %cst_19 {dimension_numbers = #tpu.dot_dimension_numbers<[1], [1], [0], [0], [0, 0, 1, 0], [], []>} : vector<8x128xbf16>, vector<8x128xbf16>, vector<8x8xf32> -> vector<8x8xf32>
    %cst_20 = arith.constant 1.250000e-01 : f32
    %48 = vector.broadcast %cst_20 : f32 to vector<8x8xf32>
    %49 = arith.mulf %47, %48 : vector<8x8xf32>
    %50 = vector.broadcast %34 : vector<1x8xf32> to vector<8x8xf32>
    %51 = arith.addf %49, %50 : vector<8x8xf32>
    %cst_21 = arith.constant dense<0xFF800000> : vector<8xf32>
    %52 = vector.multi_reduction <maximumf>, %51, %cst_21 [1] : vector<8x8xf32> to vector<8xf32>
    %53 = vector.shape_cast %52 : vector<8xf32> to vector<8x1xf32>
    %54 = vector.broadcast %53 : vector<8x1xf32> to vector<8x8xf32>
    %55 = arith.subf %51, %54 : vector<8x8xf32>
    %56 = math.exp %55 : vector<8x8xf32>
    %cst_22 = arith.constant dense<0.000000e+00> : vector<8xf32>
    %57 = vector.multi_reduction <add>, %56, %cst_22 [1] : vector<8x8xf32> to vector<8xf32>
    %58 = vector.shape_cast %57 : vector<8xf32> to vector<8x1xf32>
    %59 = tpu.reciprocal %58 {approx = true} : vector<8x1xf32> -> vector<8x1xf32>
    %60 = vector.broadcast %59 : vector<8x1xf32> to vector<8x8xf32>
    %61 = arith.mulf %56, %60 : vector<8x8xf32>
    %62 = arith.truncf %61 : vector<8x8xf32> to vector<8x8xbf16>
    %63 = arith.truncf %32 : vector<8x128xf32> to vector<8x128xbf16>
    %cst_23 = arith.constant dense<0.000000e+00> : vector<8x128xf32>
    %64 = tpu.matmul %62, %63, %cst_23 {dimension_numbers = #tpu.dot_dimension_numbers<[1], [0], [0], [1], [0, 0, 1, 1], [], []>} : vector<8x8xbf16>, vector<8x128xbf16>, vector<8x128xf32> -> vector<8x128xf32>
    %65 = arith.mulf %64, %43 : vector<8x128xf32>
    %66 = arith.addf %36, %65 : vector<8x128xf32>
    %c64_i32_24 = arith.constant 64 : i32
    %67 = vector.broadcast %c64_i32_24 : i32 to vector<8x128xi32>
    %68 = arith.cmpi sge, %35, %67 : vector<8x128xi32>
    %c128_i32 = arith.constant 128 : i32
    %69 = vector.broadcast %c128_i32 : i32 to vector<8x128xi32>
    %70 = arith.cmpi slt, %35, %69 : vector<8x128xi32>
    %71 = arith.andi %68, %70 : vector<8x128xi1>
    %72 = arith.extui %71 : vector<8x128xi1> to vector<8x128xi32>
    %73 = arith.sitofp %72 : vector<8x128xi32> to vector<8x128xf32>
    %74 = arith.mulf %30, %73 : vector<8x128xf32>
    %75 = arith.truncf %74 : vector<8x128xf32> to vector<8x128xbf16>
    %76 = arith.truncf %31 : vector<8x128xf32> to vector<8x128xbf16>
    %cst_25 = arith.constant dense<0.000000e+00> : vector<8x8xf32>
    %77 = tpu.matmul %75, %76, %cst_25 {dimension_numbers = #tpu.dot_dimension_numbers<[1], [1], [0], [0], [0, 0, 1, 0], [], []>} : vector<8x128xbf16>, vector<8x128xbf16>, vector<8x8xf32> -> vector<8x8xf32>
    %cst_26 = arith.constant 1.250000e-01 : f32
    %78 = vector.broadcast %cst_26 : f32 to vector<8x8xf32>
    %79 = arith.mulf %77, %78 : vector<8x8xf32>
    %80 = vector.broadcast %34 : vector<1x8xf32> to vector<8x8xf32>
    %81 = arith.addf %79, %80 : vector<8x8xf32>
    %cst_27 = arith.constant dense<0xFF800000> : vector<8xf32>
    %82 = vector.multi_reduction <maximumf>, %81, %cst_27 [1] : vector<8x8xf32> to vector<8xf32>
    %83 = vector.shape_cast %82 : vector<8xf32> to vector<8x1xf32>
    %84 = vector.broadcast %83 : vector<8x1xf32> to vector<8x8xf32>
    %85 = arith.subf %81, %84 : vector<8x8xf32>
    %86 = math.exp %85 : vector<8x8xf32>
    %cst_28 = arith.constant dense<0.000000e+00> : vector<8xf32>
    %87 = vector.multi_reduction <add>, %86, %cst_28 [1] : vector<8x8xf32> to vector<8xf32>
    %88 = vector.shape_cast %87 : vector<8xf32> to vector<8x1xf32>
    %89 = tpu.reciprocal %88 {approx = true} : vector<8x1xf32> -> vector<8x1xf32>
    %90 = vector.broadcast %89 : vector<8x1xf32> to vector<8x8xf32>
    %91 = arith.mulf %86, %90 : vector<8x8xf32>
    %92 = arith.truncf %91 : vector<8x8xf32> to vector<8x8xbf16>
    %93 = arith.truncf %32 : vector<8x128xf32> to vector<8x128xbf16>
    %cst_29 = arith.constant dense<0.000000e+00> : vector<8x128xf32>
    %94 = tpu.matmul %92, %93, %cst_29 {dimension_numbers = #tpu.dot_dimension_numbers<[1], [0], [0], [1], [0, 0, 1, 1], [], []>} : vector<8x8xbf16>, vector<8x128xbf16>, vector<8x128xf32> -> vector<8x128xf32>
    %95 = arith.mulf %94, %73 : vector<8x128xf32>
    %96 = arith.addf %66, %95 : vector<8x128xf32>
    %97 = arith.truncf %96 : vector<8x128xf32> to vector<8x128xbf16>
    %c0_30 = arith.constant 0 : index
    %c0_31 = arith.constant 0 : index
    %98 = vector.load %arg7[%c0_30, %c0_31] : memref<128x128xbf16, #tpu.memory_space<vmem>>, vector<128x128xbf16>
    %cst_32 = arith.constant dense<0.000000e+00> : vector<8x128xf32>
    %99 = tpu.matmul %97, %98, %cst_32 {dimension_numbers = #tpu.dot_dimension_numbers<[1], [0], [0], [1], [0, 0, 1, 1], [], []>} : vector<8x128xbf16>, vector<128x128xbf16>, vector<8x128xf32> -> vector<8x128xf32>
    %c0_33 = arith.constant 0 : index
    %c0_34 = arith.constant 0 : index
    %100 = vector.load %arg8[%c0_33, %c0_34] : memref<1x128xf32, #tpu.memory_space<vmem>>, vector<1x128xf32>
    %101 = vector.broadcast %100 : vector<1x128xf32> to vector<8x128xf32>
    %102 = arith.addf %99, %101 : vector<8x128xf32>
    %103 = arith.addf %102, %23 : vector<8x128xf32>
    %c0_35 = arith.constant 0 : index
    %c0_36 = arith.constant 0 : index
    %104 = vector.load %arg9[%c0_35, %c0_36] : memref<1x128xf32, #tpu.memory_space<vmem>>, vector<1x128xf32>
    %c0_37 = arith.constant 0 : index
    %c0_38 = arith.constant 0 : index
    %105 = vector.load %arg10[%c0_37, %c0_38] : memref<1x128xf32, #tpu.memory_space<vmem>>, vector<1x128xf32>
    %cst_39 = arith.constant dense<0.000000e+00> : vector<8xf32>
    %106 = vector.multi_reduction <add>, %103, %cst_39 [1] : vector<8x128xf32> to vector<8xf32>
    %107 = vector.shape_cast %106 : vector<8xf32> to vector<8x1xf32>
    %cst_40 = arith.constant 1.280000e+02 : f32
    %108 = vector.broadcast %cst_40 : f32 to vector<8x1xf32>
    %109 = arith.divf %107, %108 : vector<8x1xf32>
    %110 = vector.broadcast %109 : vector<8x1xf32> to vector<8x128xf32>
    %111 = arith.subf %103, %110 : vector<8x128xf32>
    %112 = arith.mulf %111, %111 : vector<8x128xf32>
    %cst_41 = arith.constant dense<0.000000e+00> : vector<8xf32>
    %113 = vector.multi_reduction <add>, %112, %cst_41 [1] : vector<8x128xf32> to vector<8xf32>
    %114 = vector.shape_cast %113 : vector<8xf32> to vector<8x1xf32>
    %cst_42 = arith.constant 1.280000e+02 : f32
    %115 = vector.broadcast %cst_42 : f32 to vector<8x1xf32>
    %116 = arith.divf %114, %115 : vector<8x1xf32>
    %cst_43 = arith.constant 9.99999996E-13 : f32
    %117 = vector.broadcast %cst_43 : f32 to vector<8x1xf32>
    %118 = arith.addf %116, %117 : vector<8x1xf32>
    %119 = math.rsqrt %118 : vector<8x1xf32>
    %120 = vector.broadcast %119 : vector<8x1xf32> to vector<8x128xf32>
    %121 = arith.mulf %111, %120 : vector<8x128xf32>
    %122 = vector.broadcast %104 : vector<1x128xf32> to vector<8x128xf32>
    %123 = arith.mulf %121, %122 : vector<8x128xf32>
    %124 = vector.broadcast %105 : vector<1x128xf32> to vector<8x128xf32>
    %125 = arith.addf %123, %124 : vector<8x128xf32>
    %126 = arith.truncf %125 : vector<8x128xf32> to vector<8x128xbf16>
    %c0_44 = arith.constant 0 : index
    %c0_45 = arith.constant 0 : index
    %127 = vector.load %arg11[%c0_44, %c0_45] : memref<128x256xbf16, #tpu.memory_space<vmem>>, vector<128x256xbf16>
    %cst_46 = arith.constant dense<0.000000e+00> : vector<8x256xf32>
    %128 = tpu.matmul %126, %127, %cst_46 {dimension_numbers = #tpu.dot_dimension_numbers<[1], [0], [0], [1], [0, 0, 1, 1], [], []>} : vector<8x128xbf16>, vector<128x256xbf16>, vector<8x256xf32> -> vector<8x256xf32>
    %c0_47 = arith.constant 0 : index
    %c0_48 = arith.constant 0 : index
    %129 = vector.load %arg12[%c0_47, %c0_48] : memref<1x256xf32, #tpu.memory_space<vmem>>, vector<1x256xf32>
    %130 = vector.broadcast %129 : vector<1x256xf32> to vector<8x256xf32>
    %131 = arith.addf %128, %130 : vector<8x256xf32>
    %cst_49 = arith.constant 5.000000e-01 : f32
    %132 = vector.broadcast %cst_49 : f32 to vector<8x256xf32>
    %133 = arith.mulf %132, %131 : vector<8x256xf32>
    %cst_50 = arith.constant 4.471500e-02 : f32
    %134 = vector.broadcast %cst_50 : f32 to vector<8x256xf32>
    %135 = arith.mulf %134, %131 : vector<8x256xf32>
    %136 = arith.mulf %135, %131 : vector<8x256xf32>
    %137 = arith.mulf %136, %131 : vector<8x256xf32>
    %138 = arith.addf %131, %137 : vector<8x256xf32>
    %cst_51 = arith.constant 0.797884583 : f32
    %139 = vector.broadcast %cst_51 : f32 to vector<8x256xf32>
    %140 = arith.mulf %139, %138 : vector<8x256xf32>
    %141 = math.tanh %140 : vector<8x256xf32>
    %cst_52 = arith.constant 1.000000e+00 : f32
    %142 = vector.broadcast %cst_52 : f32 to vector<8x256xf32>
    %143 = arith.addf %142, %141 : vector<8x256xf32>
    %144 = arith.mulf %133, %143 : vector<8x256xf32>
    %145 = arith.truncf %144 : vector<8x256xf32> to vector<8x256xbf16>
    %c0_53 = arith.constant 0 : index
    %c0_54 = arith.constant 0 : index
    %146 = vector.load %arg13[%c0_53, %c0_54] : memref<256x128xbf16, #tpu.memory_space<vmem>>, vector<256x128xbf16>
    %cst_55 = arith.constant dense<0.000000e+00> : vector<8x128xf32>
    %147 = tpu.matmul %145, %146, %cst_55 {dimension_numbers = #tpu.dot_dimension_numbers<[1], [0], [0], [1], [0, 0, 1, 1], [], []>} : vector<8x256xbf16>, vector<256x128xbf16>, vector<8x128xf32> -> vector<8x128xf32>
    %c0_56 = arith.constant 0 : index
    %c0_57 = arith.constant 0 : index
    %148 = vector.load %arg14[%c0_56, %c0_57] : memref<1x128xf32, #tpu.memory_space<vmem>>, vector<1x128xf32>
    %149 = vector.broadcast %148 : vector<1x128xf32> to vector<8x128xf32>
    %150 = arith.addf %147, %149 : vector<8x128xf32>
    %151 = arith.addf %150, %125 : vector<8x128xf32>
    %c0_58 = arith.constant 0 : index
    %c0_59 = arith.constant 0 : index
    %152 = vector.load %arg15[%c0_58, %c0_59] : memref<1x128xf32, #tpu.memory_space<vmem>>, vector<1x128xf32>
    %c0_60 = arith.constant 0 : index
    %c0_61 = arith.constant 0 : index
    %153 = vector.load %arg16[%c0_60, %c0_61] : memref<1x128xf32, #tpu.memory_space<vmem>>, vector<1x128xf32>
    %cst_62 = arith.constant dense<0.000000e+00> : vector<8xf32>
    %154 = vector.multi_reduction <add>, %151, %cst_62 [1] : vector<8x128xf32> to vector<8xf32>
    %155 = vector.shape_cast %154 : vector<8xf32> to vector<8x1xf32>
    %cst_63 = arith.constant 1.280000e+02 : f32
    %156 = vector.broadcast %cst_63 : f32 to vector<8x1xf32>
    %157 = arith.divf %155, %156 : vector<8x1xf32>
    %158 = vector.broadcast %157 : vector<8x1xf32> to vector<8x128xf32>
    %159 = arith.subf %151, %158 : vector<8x128xf32>
    %160 = arith.mulf %159, %159 : vector<8x128xf32>
    %cst_64 = arith.constant dense<0.000000e+00> : vector<8xf32>
    %161 = vector.multi_reduction <add>, %160, %cst_64 [1] : vector<8x128xf32> to vector<8xf32>
    %162 = vector.shape_cast %161 : vector<8xf32> to vector<8x1xf32>
    %cst_65 = arith.constant 1.280000e+02 : f32
    %163 = vector.broadcast %cst_65 : f32 to vector<8x1xf32>
    %164 = arith.divf %162, %163 : vector<8x1xf32>
    %cst_66 = arith.constant 9.99999996E-13 : f32
    %165 = vector.broadcast %cst_66 : f32 to vector<8x1xf32>
    %166 = arith.addf %164, %165 : vector<8x1xf32>
    %167 = math.rsqrt %166 : vector<8x1xf32>
    %168 = vector.broadcast %167 : vector<8x1xf32> to vector<8x128xf32>
    %169 = arith.mulf %159, %168 : vector<8x128xf32>
    %170 = vector.broadcast %152 : vector<1x128xf32> to vector<8x128xf32>
    %171 = arith.mulf %169, %170 : vector<8x128xf32>
    %172 = vector.broadcast %153 : vector<1x128xf32> to vector<8x128xf32>
    %173 = arith.addf %171, %172 : vector<8x128xf32>
    %174 = vector.extract_strided_slice %173 {offsets = [0, 0], sizes = [1, 128], strides = [1, 1]} : vector<8x128xf32> to vector<1x128xf32>
    %175 = arith.truncf %174 : vector<1x128xf32> to vector<1x128xbf16>
    %c0_67 = arith.constant 0 : index
    %c0_68 = arith.constant 0 : index
    %176 = vector.load %arg17[%c0_67, %c0_68] : memref<128x128xbf16, #tpu.memory_space<vmem>>, vector<128x128xbf16>
    %cst_69 = arith.constant dense<0.000000e+00> : vector<1x128xf32>
    %177 = tpu.matmul %175, %176, %cst_69 {dimension_numbers = #tpu.dot_dimension_numbers<[1], [0], [0], [1], [0, 0, 1, 1], [], []>} : vector<1x128xbf16>, vector<128x128xbf16>, vector<1x128xf32> -> vector<1x128xf32>
    %c0_70 = arith.constant 0 : index
    %c0_71 = arith.constant 0 : index
    %178 = vector.load %arg18[%c0_70, %c0_71] : memref<1x128xf32, #tpu.memory_space<vmem>>, vector<1x128xf32>
    %179 = arith.addf %177, %178 : vector<1x128xf32>
    %180 = math.tanh %179 : vector<1x128xf32>
    %181 = arith.truncf %180 : vector<1x128xf32> to vector<1x128xbf16>
    %c0_72 = arith.constant 0 : index
    %c0_73 = arith.constant 0 : index
    %182 = vector.load %arg19[%c0_72, %c0_73] : memref<128x128xbf16, #tpu.memory_space<vmem>>, vector<128x128xbf16>
    %cst_74 = arith.constant dense<0.000000e+00> : vector<1x128xf32>
    %183 = tpu.matmul %181, %182, %cst_74 {dimension_numbers = #tpu.dot_dimension_numbers<[1], [0], [0], [1], [0, 0, 1, 1], [], []>} : vector<1x128xbf16>, vector<128x128xbf16>, vector<1x128xf32> -> vector<1x128xf32>
    %c0_75 = arith.constant 0 : index
    %c0_76 = arith.constant 0 : index
    %184 = vector.load %arg20[%c0_75, %c0_76] : memref<1x128xf32, #tpu.memory_space<vmem>>, vector<1x128xf32>
    %185 = arith.addf %183, %184 : vector<1x128xf32>
    %c0_77 = arith.constant 0 : index
    %c0_78 = arith.constant 0 : index
    %c0_79 = arith.constant 0 : index
    %186 = vector.load %arg21[%c0_77, %c0_78, %c0_79] : memref<1x1x128xf32, #tpu.memory_space<vmem>>, vector<1x1x128xf32>
    %187 = vector.shape_cast %186 : vector<1x1x128xf32> to vector<1x128xf32>
    %188 = vector.shape_cast %185 : vector<1x128xf32> to vector<1x1x128xf32>
    tpu.vector_store %arg21[%c0_77, %c0_78, %c0_79], %188 {strides = array<i32>} : memref<1x1x128xf32, #tpu.memory_space<vmem>>, vector<1x1x128xf32>,
    return
  }
  func.func @transform_0(%arg0: i32) -> (i32, i32, i32) {
    %c0_i32 = arith.constant 0 : i32
    %c0_i32_0 = arith.constant 0 : i32
    %c0_i32_1 = arith.constant 0 : i32
    return %arg0, %c0_i32, %c0_i32_0 : i32, i32, i32
  }
  func.func @transform_1(%arg0: i32) -> (i32, i32, i32) {
    %c0_i32 = arith.constant 0 : i32
    %c0_i32_0 = arith.constant 0 : i32
    %c0_i32_1 = arith.constant 0 : i32
    return %arg0, %c0_i32, %c0_i32_0 : i32, i32, i32
  }
  func.func @transform_2(%arg0: i32) -> (i32, i32) {
    %c0_i32 = arith.constant 0 : i32
    %c0_i32_0 = arith.constant 0 : i32
    %c0_i32_1 = arith.constant 0 : i32
    return %c0_i32, %c0_i32_0 : i32, i32
  }
  func.func @transform_3(%arg0: i32) -> (i32, i32) {
    %c0_i32 = arith.constant 0 : i32
    %c0_i32_0 = arith.constant 0 : i32
    %c0_i32_1 = arith.constant 0 : i32
    return %c0_i32, %c0_i32_0 : i32, i32
  }
  func.func @transform_4(%arg0: i32) -> (i32, i32) {
    %c0_i32 = arith.constant 0 : i32
    %c0_i32_0 = arith.constant 0 : i32
    %c0_i32_1 = arith.constant 0 : i32
    return %c0_i32, %c0_i32_0 : i32, i32
  }
  func.func @transform_5(%arg0: i32) -> (i32, i32) {
    %c0_i32 = arith.constant 0 : i32
    %c0_i32_0 = arith.constant 0 : i32
    %c0_i32_1 = arith.constant 0 : i32
    return %c0_i32, %c0_i32_0 : i32, i32
  }
  func.func @transform_6(%arg0: i32) -> (i32, i32) {
    %c0_i32 = arith.constant 0 : i32
    %c0_i32_0 = arith.constant 0 : i32
    %c0_i32_1 = arith.constant 0 : i32
    return %c0_i32, %c0_i32_0 : i32, i32
  }
  func.func @transform_7(%arg0: i32) -> (i32, i32) {
    %c0_i32 = arith.constant 0 : i32
    %c0_i32_0 = arith.constant 0 : i32
    %c0_i32_1 = arith.constant 0 : i32
    return %c0_i32, %c0_i32_0 : i32, i32
  }
  func.func @transform_8(%arg0: i32) -> (i32, i32) {
    %c0_i32 = arith.constant 0 : i32
    %c0_i32_0 = arith.constant 0 : i32
    %c0_i32_1 = arith.constant 0 : i32
    return %c0_i32, %c0_i32_0 : i32, i32
  }
  func.func @transform_9(%arg0: i32) -> (i32, i32) {
    %c0_i32 = arith.constant 0 : i32
    %c0_i32_0 = arith.constant 0 : i32
    %c0_i32_1 = arith.constant 0 : i32
    return %c0_i32, %c0_i32_0 : i32, i32
  }
  func.func @transform_10(%arg0: i32) -> (i32, i32) {
    %c0_i32 = arith.constant 0 : i32
    %c0_i32_0 = arith.constant 0 : i32
    %c0_i32_1 = arith.constant 0 : i32
    return %c0_i32, %c0_i32_0 : i32, i32
  }
  func.func @transform_11(%arg0: i32) -> (i32, i32) {
    %c0_i32 = arith.constant 0 : i32
    %c0_i32_0 = arith.constant 0 : i32
    %c0_i32_1 = arith.constant 0 : i32
    return %c0_i32, %c0_i32_0 : i32, i32
  }
  func.func @transform_12(%arg0: i32) -> (i32, i32) {
    %c0_i32 = arith.constant 0 : i32
    %c0_i32_0 = arith.constant 0 : i32
    %c0_i32_1 = arith.constant 0 : i32
    return %c0_i32, %c0_i32_0 : i32, i32
  }
  func.func @transform_13(%arg0: i32) -> (i32, i32) {
    %c0_i32 = arith.constant 0 : i32
    %c0_i32_0 = arith.constant 0 : i32
    %c0_i32_1 = arith.constant 0 : i32
    return %c0_i32, %c0_i32_0 : i32, i32
  }
  func.func @transform_14(%arg0: i32) -> (i32, i32) {
    %c0_i32 = arith.constant 0 : i32
    %c0_i32_0 = arith.constant 0 : i32
    %c0_i32_1 = arith.constant 0 : i32
    return %c0_i32, %c0_i32_0 : i32, i32
  }
  func.func @transform_15(%arg0: i32) -> (i32, i32) {
    %c0_i32 = arith.constant 0 : i32
    %c0_i32_0 = arith.constant 0 : i32
    %c0_i32_1 = arith.constant 0 : i32
    return %c0_i32, %c0_i32_0 : i32, i32
  }
  func.func @transform_16(%arg0: i32) -> (i32, i32) {
    %c0_i32 = arith.constant 0 : i32
    %c0_i32_0 = arith.constant 0 : i32
    %c0_i32_1 = arith.constant 0 : i32
    return %c0_i32, %c0_i32_0 : i32, i32
  }
  func.func @transform_17(%arg0: i32) -> (i32, i32) {
    %c0_i32 = arith.constant 0 : i32
    %c0_i32_0 = arith.constant 0 : i32
    %c0_i32_1 = arith.constant 0 : i32
    return %c0_i32, %c0_i32_0 : i32, i32
  }
  func.func @transform_18(%arg0: i32) -> (i32, i32) {
    %c0_i32 = arith.constant 0 : i32
    %c0_i32_0 = arith.constant 0 : i32
    %c0_i32_1 = arith.constant 0 : i32
    return %c0_i32, %c0_i32_0 : i32, i32
  }
  func.func @transform_19(%arg0: i32) -> (i32, i32) {
    %c0_i32 = arith.constant 0 : i32
    %c0_i32_0 = arith.constant 0 : i32
    %c0_i32_1 = arith.constant 0 : i32
    return %c0_i32, %c0_i32_0 : i32, i32
  }
  func.func @transform_20(%arg0: i32) -> (i32, i32, i32) {
    %c0_i32 = arith.constant 0 : i32
    %c0_i32_0 = arith.constant 0 : i32
    %c0_i32_1 = arith.constant 0 : i32
    return %arg0, %c0_i32, %c0_i32_0 : i32, i32, i32
  }
}

</mosaic_0001>

<llo_original>
// kernel: classifier_net_forward.1
$region0: #{classifier_net_forward.1}
  #allocation0 [shape = 'u32[]', space=smem, size = 0x4, offset = 0x4, fixed_abs, tag = 'smem constant byte address 0x4 - core index']
  #allocation1 [shape = 'u32[144,128]{1,0:T(1,128)}', space=vmem, size = 0x12000, scoped, tag = 'internal scratch']
  %s0 = inlined_call_operand.vmem [shape: f32[2,8,128], index: 0, kind: input, shape index: {}]
  %s1 = inlined_call_operand.vmem [shape: f32[2,1,8], index: 1, kind: input, shape index: {}]
  %s2 = inlined_call_operand.vmem [shape: f32[1,128], index: 2, kind: input, shape index: {}]
  %s3 = inlined_call_operand.vmem [shape: f32[1,128], index: 3, kind: input, shape index: {}]
  %s4 = inlined_call_operand.vmem [shape: bf16[128,384], index: 4, kind: input, shape index: {}]
  %s5 = inlined_call_operand.vmem [shape: f32[1,384], index: 5, kind: input, shape index: {}]
  %s6 = inlined_call_operand.vmem [shape: bf16[128,128], index: 6, kind: input, shape index: {}]
  %s7 = inlined_call_operand.vmem [shape: f32[1,128], index: 7, kind: input, shape index: {}]
  %s8 = inlined_call_operand.vmem [shape: f32[1,128], index: 8, kind: input, shape index: {}]
  %s9 = inlined_call_operand.vmem [shape: f32[1,128], index: 9, kind: input, shape index: {}]
  %s10 = inlined_call_operand.vmem [shape: bf16[128,256], index: 10, kind: input, shape index: {}]
  %s11 = inlined_call_operand.vmem [shape: f32[1,256], index: 11, kind: input, shape index: {}]
  %s12 = inlined_call_operand.vmem [shape: bf16[256,128], index: 12, kind: input, shape index: {}]
  %s13 = inlined_call_operand.vmem [shape: f32[1,128], index: 13, kind: input, shape index: {}]
  %s14 = inlined_call_operand.vmem [shape: f32[1,128], index: 14, kind: input, shape index: {}]
  %s15 = inlined_call_operand.vmem [shape: f32[1,128], index: 15, kind: input, shape index: {}]
  %s16 = inlined_call_operand.vmem [shape: bf16[128,128], index: 16, kind: input, shape index: {}]
  %s17 = inlined_call_operand.vmem [shape: f32[1,128], index: 17, kind: input, shape index: {}]
  %s18 = inlined_call_operand.vmem [shape: bf16[128,128], index: 18, kind: input, shape index: {}]
  %s19 = inlined_call_operand.vmem [shape: f32[1,128], index: 19, kind: input, shape index: {}]
  %s20 = inlined_call_operand.hbm [shape: f32[2,1,128], index: 20, kind: output, shape index: {}]
  %s21 = sld [smem:[#allocation0]]
  $region113: #{classifier_net_forward.1} parent=0
    _
  %s23 = ssub.s32 1, %s21
  %s24 = scalar_select 0, %s23, %s21
  $region1: #{classifier_net_forward.1} parent=0
    #allocation2 [shape = 'u8[1024]{0}', space=vmem, size = 0x400, scoped, tag = 'output window, operand 0']
    #allocation3 [shape = 's32[2]{0}', space=sflag, size = 0x8, scoped, tag = 'scoped memory for classifier_net_forward.1']
    %25 = vsyncpa [#allocation3], 0
    %s26 = scalar_lea.sflag [#allocation3], 1
    %27 = vsyncpa %s26, 0
    loop: start=0, step=1, limit=4
    $region2: #{classifier_net_forward.1} parent=1 // loop_pre_header
      _
    $region3: #{classifier_net_forward.1} parent=1 // loop_header
      %s29 = sphi 0, %s33
      %p30 = scmp.ge.s32.totalorder %s29, 4
      %s39 = sphi 0, %s41
      %s42 = sphi 0, %s39
      %s43 = sphi 0, %s42
      %s59 = sphi 0, %s43
      %s65 = sphi 0, %s67
      %s68 = sphi 0, %s65
      %s69 = sphi 0, %s68
      %s85 = sphi 0, %s69
      %s89 = sphi 0, %s89
      %s91 = sphi 0, %s89
      %s92 = sphi 0, %s91
      %s106 = sphi 0, %s92
      %s110 = sphi 0, %s110
      %s112 = sphi 0, %s110
      %s113 = sphi 0, %s112
      %s127 = sphi 0, %s113
      %s131 = sphi 0, %s131
      %s133 = sphi 0, %s131
      %s134 = sphi 0, %s133
      %s148 = sphi 0, %s134
      %s152 = sphi 0, %s152
      %s154 = sphi 0, %s152
      %s155 = sphi 0, %s154
      %s169 = sphi 0, %s155
      %s173 = sphi 0, %s173
      %s175 = sphi 0, %s173
      %s176 = sphi 0, %s175
      %s190 = sphi 0, %s176
      %s194 = sphi 0, %s194
      %s196 = sphi 0, %s194
      %s197 = sphi 0, %s196
      %s211 = sphi 0, %s197
      %s215 = sphi 0, %s215
      %s217 = sphi 0, %s215
      %s218 = sphi 0, %s217
      %s232 = sphi 0, %s218
      %s236 = sphi 0, %s236
      %s238 = sphi 0, %s236
      %s239 = sphi 0, %s238
      %s253 = sphi 0, %s239
      %s257 = sphi 0, %s257
      %s259 = sphi 0, %s257
      %s260 = sphi 0, %s259
      %s274 = sphi 0, %s260
      %s278 = sphi 0, %s278
      %s280 = sphi 0, %s278
      %s281 = sphi 0, %s280
      %s295 = sphi 0, %s281
      %s299 = sphi 0, %s299
      %s301 = sphi 0, %s299
      %s302 = sphi 0, %s301
      %s316 = sphi 0, %s302
      %s320 = sphi 0, %s320
      %s322 = sphi 0, %s320
      %s323 = sphi 0, %s322
      %s337 = sphi 0, %s323
      %s341 = sphi 0, %s341
      %s343 = sphi 0, %s341
      %s344 = sphi 0, %s343
      %s358 = sphi 0, %s344
      %s362 = sphi 0, %s362
      %s364 = sphi 0, %s362
      %s365 = sphi 0, %s364
      %s379 = sphi 0, %s365
      %s383 = sphi 0, %s383
      %s385 = sphi 0, %s383
      %s386 = sphi 0, %s385
      %s400 = sphi 0, %s386
      %s404 = sphi 0, %s404
      %s406 = sphi 0, %s404
      %s407 = sphi 0, %s406
      %s421 = sphi 0, %s407
      %s425 = sphi 0, %s425
      %s427 = sphi 0, %s425
      %s428 = sphi 0, %s427
      %s442 = sphi 0, %s428
      %s446 = sphi 0, %s446
      %s448 = sphi 0, %s446
      %s449 = sphi 0, %s448
      %s463 = sphi 0, %s449
      %s469 = sphi 0, %s471
      %s472 = sphi 0, %s469
      %s473 = sphi 0, %s472
      %s489 = sphi 0, %s473
    $region4: #{classifier_net_forward.1} parent=1 // loop_header_branch
      %32 = sbr.rel (%p30) target = $region8
    $region5: #{classifier_net_forward.1} parent=1 // loop_body
      %s34 = ssub.s32 %s29, 1
      %s35 = ssub.s32 %s29, 2
      %s36 = sadd.s32 %s29, 1
      %s37 = ssub.s32 %s29, %s36
      %p38 = scmp.eq.s32.totalorder %s37, 0
      %s40 = sadd.s32 %s39, 1
      %s41 = scalar_select %p38, %s39, %s40
      %p44 = pneg %p38
      %p45 = scmp.eq.s32.totalorder %s29, 1
      %p46 = por %p44, %p45
      %p47 = scmp.ne.s32.totalorder %s39, %s42
      %p48 = scmp.eq.s32.totalorder %s29, 0
      %p49 = por %p47, %p48
      %p50 = scmp.ne.s32.totalorder %s39, %s42
      %p51 = scmp.eq.s32.totalorder %s34, 1
      %p52 = por %p50, %p51
      %p53 = scmp.ne.s32.totalorder %s42, %s43
      %p54 = scmp.eq.s32.totalorder %s34, 0
      %p55 = por %p53, %p54
      %p56 = scmp.ne.s32.totalorder %s42, %s43
      %p57 = scmp.eq.s32.totalorder %s35, 1
      %p58 = por %p56, %p57
      %p60 = scmp.ne.s32.totalorder %s43, %s59
      %p61 = scmp.eq.s32.totalorder %s35, 0
      %p62 = por %p60, %p61
      %s63 = ssub.s32 %s29, %s36
      %p64 = scmp.eq.s32.totalorder %s63, 0
      %s66 = sadd.s32 %s65, 1
      %s67 = scalar_select %p64, %s65, %s66
      %p70 = pneg %p64
      %p71 = scmp.eq.s32.totalorder %s29, 1
      %p72 = por %p70, %p71
      %p73 = scmp.ne.s32.totalorder %s65, %s68
      %p74 = scmp.eq.s32.totalorder %s29, 0
      %p75 = por %p73, %p74
      %p76 = scmp.ne.s32.totalorder %s65, %s68
      %p77 = scmp.eq.s32.totalorder %s34, 1
      %p78 = por %p76, %p77
      %p79 = scmp.ne.s32.totalorder %s68, %s69
      %p80 = scmp.eq.s32.totalorder %s34, 0
      %p81 = por %p79, %p80
      %p82 = scmp.ne.s32.totalorder %s68, %s69
      %p83 = scmp.eq.s32.totalorder %s35, 1
      %p84 = por %p82, %p83
      %p86 = scmp.ne.s32.totalorder %s69, %s85
      %p87 = scmp.eq.s32.totalorder %s35, 0
      %p88 = por %p86, %p87
      %s90 = sadd.s32 %s89, 1
      %p93 = scmp.eq.s32.totalorder %s29, 1
      %p94 = scmp.ne.s32.totalorder %s89, %s91
      %p95 = scmp.eq.s32.totalorder %s29, 0
      %p96 = por %p94, %p95
      %p97 = scmp.ne.s32.totalorder %s89, %s91
      %p98 = scmp.eq.s32.totalorder %s34, 1
      %p99 = por %p97, %p98
      %p100 = scmp.ne.s32.totalorder %s91, %s92
      %p101 = scmp.eq.s32.totalorder %s34, 0
      %p102 = por %p100, %p101
      %p103 = scmp.ne.s32.totalorder %s91, %s92
      %p104 = scmp.eq.s32.totalorder %s35, 1
      %p105 = por %p103, %p104
      %p107 = scmp.ne.s32.totalorder %s92, %s106
      %p108 = scmp.eq.s32.totalorder %s35, 0
      %p109 = por %p107, %p108
      %s111 = sadd.s32 %s110, 1
      %p114 = scmp.eq.s32.totalorder %s29, 1
      %p115 = scmp.ne.s32.totalorder %s110, %s112
      %p116 = scmp.eq.s32.totalorder %s29, 0
      %p117 = por %p115, %p116
      %p118 = scmp.ne.s32.totalorder %s110, %s112
      %p119 = scmp.eq.s32.totalorder %s34, 1
      %p120 = por %p118, %p119
      %p121 = scmp.ne.s32.totalorder %s112, %s113
      %p122 = scmp.eq.s32.totalorder %s34, 0
      %p123 = por %p121, %p122
      %p124 = scmp.ne.s32.totalorder %s112, %s113
      %p125 = scmp.eq.s32.totalorder %s35, 1
      %p126 = por %p124, %p125
      %p128 = scmp.ne.s32.totalorder %s113, %s127
      %p129 = scmp.eq.s32.totalorder %s35, 0
      %p130 = por %p128, %p129
      %s132 = sadd.s32 %s131, 1
      %p135 = scmp.eq.s32.totalorder %s29, 1
      %p136 = scmp.ne.s32.totalorder %s131, %s133
      %p137 = scmp.eq.s32.totalorder %s29, 0
      %p138 = por %p136, %p137
      %p139 = scmp.ne.s32.totalorder %s131, %s133
      %p140 = scmp.eq.s32.totalorder %s34, 1
      %p141 = por %p139, %p140
      %p142 = scmp.ne.s32.totalorder %s133, %s134
      %p143 = scmp.eq.s32.totalorder %s34, 0
      %p144 = por %p142, %p143
      %p145 = scmp.ne.s32.totalorder %s133, %s134
      %p146 = scmp.eq.s32.totalorder %s35, 1
      %p147 = por %p145, %p146
      %p149 = scmp.ne.s32.totalorder %s134, %s148
      %p150 = scmp.eq.s32.totalorder %s35, 0
      %p151 = por %p149, %p150
      %s153 = sadd.s32 %s152, 1
      %p156 = scmp.eq.s32.totalorder %s29, 1
      %p157 = scmp.ne.s32.totalorder %s152, %s154
      %p158 = scmp.eq.s32.totalorder %s29, 0
      %p159 = por %p157, %p158
      %p160 = scmp.ne.s32.totalorder %s152, %s154
      %p161 = scmp.eq.s32.totalorder %s34, 1
      %p162 = por %p160, %p161
      %p163 = scmp.ne.s32.totalorder %s154, %s155
      %p164 = scmp.eq.s32.totalorder %s34, 0
      %p165 = por %p163, %p164
      %p166 = scmp.ne.s32.totalorder %s154, %s155
      %p167 = scmp.eq.s32.totalorder %s35, 1
      %p168 = por %p166, %p167
      %p170 = scmp.ne.s32.totalorder %s155, %s169
      %p171 = scmp.eq.s32.totalorder %s35, 0
      %p172 = por %p170, %p171
      %s174 = sadd.s32 %s173, 1
      %p177 = scmp.eq.s32.totalorder %s29, 1
      %p178 = scmp.ne.s32.totalorder %s173, %s175
      %p179 = scmp.eq.s32.totalorder %s29, 0
      %p180 = por %p178, %p179
      %p181 = scmp.ne.s32.totalorder %s173, %s175
      %p182 = scmp.eq.s32.totalorder %s34, 1
      %p183 = por %p181, %p182
      %p184 = scmp.ne.s32.totalorder %s175, %s176
      %p185 = scmp.eq.s32.totalorder %s34, 0
      %p186 = por %p184, %p185
      %p187 = scmp.ne.s32.totalorder %s175, %s176
      %p188 = scmp.eq.s32.totalorder %s35, 1
      %p189 = por %p187, %p188
      %p191 = scmp.ne.s32.totalorder %s176, %s190
      %p192 = scmp.eq.s32.totalorder %s35, 0
      %p193 = por %p191, %p192
      %s195 = sadd.s32 %s194, 1
      %p198 = scmp.eq.s32.totalorder %s29, 1
      %p199 = scmp.ne.s32.totalorder %s194, %s196
      %p200 = scmp.eq.s32.totalorder %s29, 0
      %p201 = por %p199, %p200
      %p202 = scmp.ne.s32.totalorder %s194, %s196
      %p203 = scmp.eq.s32.totalorder %s34, 1
      %p204 = por %p202, %p203
      %p205 = scmp.ne.s32.totalorder %s196, %s197
      %p206 = scmp.eq.s32.totalorder %s34, 0
      %p207 = por %p205, %p206
      %p208 = scmp.ne.s32.totalorder %s196, %s197
      %p209 = scmp.eq.s32.totalorder %s35, 1
      %p210 = por %p208, %p209
      %p212 = scmp.ne.s32.totalorder %s197, %s211
      %p213 = scmp.eq.s32.totalorder %s35, 0
      %p214 = por %p212, %p213
      %s216 = sadd.s32 %s215, 1
      %p219 = scmp.eq.s32.totalorder %s29, 1
      %p220 = scmp.ne.s32.totalorder %s215, %s217
      %p221 = scmp.eq.s32.totalorder %s29, 0
      %p222 = por %p220, %p221
      %p223 = scmp.ne.s32.totalorder %s215, %s217
      %p224 = scmp.eq.s32.totalorder %s34, 1
      %p225 = por %p223, %p224
      %p226 = scmp.ne.s32.totalorder %s217, %s218
      %p227 = scmp.eq.s32.totalorder %s34, 0
      %p228 = por %p226, %p227
      %p229 = scmp.ne.s32.totalorder %s217, %s218
      %p230 = scmp.eq.s32.totalorder %s35, 1
      %p231 = por %p229, %p230
      %p233 = scmp.ne.s32.totalorder %s218, %s232
      %p234 = scmp.eq.s32.totalorder %s35, 0
      %p235 = por %p233, %p234
      %s237 = sadd.s32 %s236, 1
      %p240 = scmp.eq.s32.totalorder %s29, 1
      %p241 = scmp.ne.s32.totalorder %s236, %s238
      %p242 = scmp.eq.s32.totalorder %s29, 0
      %p243 = por %p241, %p242
      %p244 = scmp.ne.s32.totalorder %s236, %s238
      %p245 = scmp.eq.s32.totalorder %s34, 1
      %p246 = por %p244, %p245
      %p247 = scmp.ne.s32.totalorder %s238, %s239
      %p248 = scmp.eq.s32.totalorder %s34, 0
      %p249 = por %p247, %p248
      %p250 = scmp.ne.s32.totalorder %s238, %s239
      %p251 = scmp.eq.s32.totalorder %s35, 1
      %p252 = por %p250, %p251
      %p254 = scmp.ne.s32.totalorder %s239, %s253
      %p255 = scmp.eq.s32.totalorder %s35, 0
      %p256 = por %p254, %p255
      %s258 = sadd.s32 %s257, 1
      %p261 = scmp.eq.s32.totalorder %s29, 1
      %p262 = scmp.ne.s32.totalorder %s257, %s259
      %p263 = scmp.eq.s32.totalorder %s29, 0
      %p264 = por %p262, %p263
      %p265 = scmp.ne.s32.totalorder %s257, %s259
      %p266 = scmp.eq.s32.totalorder %s34, 1
      %p267 = por %p265, %p266
      %p268 = scmp.ne.s32.totalorder %s259, %s260
      %p269 = scmp.eq.s32.totalorder %s34, 0
      %p270 = por %p268, %p269
      %p271 = scmp.ne.s32.totalorder %s259, %s260
      %p272 = scmp.eq.s32.totalorder %s35, 1
      %p273 = por %p271, %p272
      %p275 = scmp.ne.s32.totalorder %s260, %s274
      %p276 = scmp.eq.s32.totalorder %s35, 0
      %p277 = por %p275, %p276
      %s279 = sadd.s32 %s278, 1
      %p282 = scmp.eq.s32.totalorder %s29, 1
      %p283 = scmp.ne.s32.totalorder %s278, %s280
      %p284 = scmp.eq.s32.totalorder %s29, 0
      %p285 = por %p283, %p284
      %p286 = scmp.ne.s32.totalorder %s278, %s280
      %p287 = scmp.eq.s32.totalorder %s34, 1
      %p288 = por %p286, %p287
      %p289 = scmp.ne.s32.totalorder %s280, %s281
      %p290 = scmp.eq.s32.totalorder %s34, 0
      %p291 = por %p289, %p290
      %p292 = scmp.ne.s32.totalorder %s280, %s281
      %p293 = scmp.eq.s32.totalorder %s35, 1
      %p294 = por %p292, %p293
      %p296 = scmp.ne.s32.totalorder %s281, %s295
      %p297 = scmp.eq.s32.totalorder %s35, 0
      %p298 = por %p296, %p297
      %s300 = sadd.s32 %s299, 1
      %p303 = scmp.eq.s32.totalorder %s29, 1
      %p304 = scmp.ne.s32.totalorder %s299, %s301
      %p305 = scmp.eq.s32.totalorder %s29, 0
      %p306 = por %p304, %p305
      %p307 = scmp.ne.s32.totalorder %s299, %s301
      %p308 = scmp.eq.s32.totalorder %s34, 1
      %p309 = por %p307, %p308
      %p310 = scmp.ne.s32.totalorder %s301, %s302
      %p311 = scmp.eq.s32.totalorder %s34, 0
      %p312 = por %p310, %p311
      %p313 = scmp.ne.s32.totalorder %s301, %s302
      %p314 = scmp.eq.s32.totalorder %s35, 1
      %p315 = por %p313, %p314
      %p317 = scmp.ne.s32.totalorder %s302, %s316
      %p318 = scmp.eq.s32.totalorder %s35, 0
      %p319 = por %p317, %p318
      %s321 = sadd.s32 %s320, 1
      %p324 = scmp.eq.s32.totalorder %s29, 1
      %p325 = scmp.ne.s32.totalorder %s320, %s322
      %p326 = scmp.eq.s32.totalorder %s29, 0
      %p327 = por %p325, %p326
      %p328 = scmp.ne.s32.totalorder %s320, %s322
      %p329 = scmp.eq.s32.totalorder %s34, 1
      %p330 = por %p328, %p329
      %p331 = scmp.ne.s32.totalorder %s322, %s323
      %p332 = scmp.eq.s32.totalorder %s34, 0
      %p333 = por %p331, %p332
      %p334 = scmp.ne.s32.totalorder %s322, %s323
      %p335 = scmp.eq.s32.totalorder %s35, 1
      %p336 = por %p334, %p335
      %p338 = scmp.ne.s32.totalorder %s323, %s337
      %p339 = scmp.eq.s32.totalorder %s35, 0
      %p340 = por %p338, %p339
      %s342 = sadd.s32 %s341, 1
      %p345 = scmp.eq.s32.totalorder %s29, 1
      %p346 = scmp.ne.s32.totalorder %s341, %s343
      %p347 = scmp.eq.s32.totalorder %s29, 0
      %p348 = por %p346, %p347
      %p349 = scmp.ne.s32.totalorder %s341, %s343
      %p350 = scmp.eq.s32.totalorder %s34, 1
      %p351 = por %p349, %p350
      %p352 = scmp.ne.s32.totalorder %s343, %s344
      %p353 = scmp.eq.s32.totalorder %s34, 0
      %p354 = por %p352, %p353
      %p355 = scmp.ne.s32.totalorder %s343, %s344
      %p356 = scmp.eq.s32.totalorder %s35, 1
      %p357 = por %p355, %p356
      %p359 = scmp.ne.s32.totalorder %s344, %s358
      %p360 = scmp.eq.s32.totalorder %s35, 0
      %p361 = por %p359, %p360
      %s363 = sadd.s32 %s362, 1
      %p366 = scmp.eq.s32.totalorder %s29, 1
      %p367 = scmp.ne.s32.totalorder %s362, %s364
      %p368 = scmp.eq.s32.totalorder %s29, 0
      %p369 = por %p367, %p368
      %p370 = scmp.ne.s32.totalorder %s362, %s364
      %p371 = scmp.eq.s32.totalorder %s34, 1
      %p372 = por %p370, %p371
      %p373 = scmp.ne.s32.totalorder %s364, %s365
      %p374 = scmp.eq.s32.totalorder %s34, 0
      %p375 = por %p373, %p374
      %p376 = scmp.ne.s32.totalorder %s364, %s365
      %p377 = scmp.eq.s32.totalorder %s35, 1
      %p378 = por %p376, %p377
      %p380 = scmp.ne.s32.totalorder %s365, %s379
      %p381 = scmp.eq.s32.totalorder %s35, 0
      %p382 = por %p380, %p381
      %s384 = sadd.s32 %s383, 1
      %p387 = scmp.eq.s32.totalorder %s29, 1
      %p388 = scmp.ne.s32.totalorder %s383, %s385
      %p389 = scmp.eq.s32.totalorder %s29, 0
      %p390 = por %p388, %p389
      %p391 = scmp.ne.s32.totalorder %s383, %s385
      %p392 = scmp.eq.s32.totalorder %s34, 1
      %p393 = por %p391, %p392
      %p394 = scmp.ne.s32.totalorder %s385, %s386
      %p395 = scmp.eq.s32.totalorder %s34, 0
      %p396 = por %p394, %p395
      %p397 = scmp.ne.s32.totalorder %s385, %s386
      %p398 = scmp.eq.s32.totalorder %s35, 1
      %p399 = por %p397, %p398
      %p401 = scmp.ne.s32.totalorder %s386, %s400
      %p402 = scmp.eq.s32.totalorder %s35, 0
      %p403 = por %p401, %p402
      %s405 = sadd.s32 %s404, 1
      %p408 = scmp.eq.s32.totalorder %s29, 1
      %p409 = scmp.ne.s32.totalorder %s404, %s406
      %p410 = scmp.eq.s32.totalorder %s29, 0
      %p411 = por %p409, %p410
      %p412 = scmp.ne.s32.totalorder %s404, %s406
      %p413 = scmp.eq.s32.totalorder %s34, 1
      %p414 = por %p412, %p413
      %p415 = scmp.ne.s32.totalorder %s406, %s407
      %p416 = scmp.eq.s32.totalorder %s34, 0
      %p417 = por %p415, %p416
      %p418 = scmp.ne.s32.totalorder %s406, %s407
      %p419 = scmp.eq.s32.totalorder %s35, 1
      %p420 = por %p418, %p419
      %p422 = scmp.ne.s32.totalorder %s407, %s421
      %p423 = scmp.eq.s32.totalorder %s35, 0
      %p424 = por %p422, %p423
      %s426 = sadd.s32 %s425, 1
      %p429 = scmp.eq.s32.totalorder %s29, 1
      %p430 = scmp.ne.s32.totalorder %s425, %s427
      %p431 = scmp.eq.s32.totalorder %s29, 0
      %p432 = por %p430, %p431
      %p433 = scmp.ne.s32.totalorder %s425, %s427
      %p434 = scmp.eq.s32.totalorder %s34, 1
      %p435 = por %p433, %p434
      %p436 = scmp.ne.s32.totalorder %s427, %s428
      %p437 = scmp.eq.s32.totalorder %s34, 0
      %p438 = por %p436, %p437
      %p439 = scmp.ne.s32.totalorder %s427, %s428
      %p440 = scmp.eq.s32.totalorder %s35, 1
      %p441 = por %p439, %p440
      %p443 = scmp.ne.s32.totalorder %s428, %s442
      %p444 = scmp.eq.s32.totalorder %s35, 0
      %p445 = por %p443, %p444
      %s447 = sadd.s32 %s446, 1
      %p450 = scmp.eq.s32.totalorder %s29, 1
      %p451 = scmp.ne.s32.totalorder %s446, %s448
      %p452 = scmp.eq.s32.totalorder %s29, 0
      %p453 = por %p451, %p452
      %p454 = scmp.ne.s32.totalorder %s446, %s448
      %p455 = scmp.eq.s32.totalorder %s34, 1
      %p456 = por %p454, %p455
      %p457 = scmp.ne.s32.totalorder %s448, %s449
      %p458 = scmp.eq.s32.totalorder %s34, 0
      %p459 = por %p457, %p458
      %p460 = scmp.ne.s32.totalorder %s448, %s449
      %p461 = scmp.eq.s32.totalorder %s35, 1
      %p462 = por %p460, %p461
      %p464 = scmp.ne.s32.totalorder %s449, %s463
      %p465 = scmp.eq.s32.totalorder %s35, 0
      %p466 = por %p464, %p465
      %s467 = ssub.s32 %s29, %s36
      %p468 = scmp.eq.s32.totalorder %s467, 0
      %s470 = sadd.s32 %s469, 1
      %s471 = scalar_select %p468, %s469, %s470
      %p474 = pneg %p468
      %p475 = scmp.eq.s32.totalorder %s29, 1
      %p476 = por %p474, %p475
      %p477 = scmp.ne.s32.totalorder %s469, %s472
      %p478 = scmp.eq.s32.totalorder %s29, 0
      %p479 = por %p477, %p478
      %p480 = scmp.ne.s32.totalorder %s469, %s472
      %p481 = scmp.eq.s32.totalorder %s34, 1
      %p482 = por %p480, %p481
      %p483 = scmp.ne.s32.totalorder %s472, %s473
      %p484 = scmp.eq.s32.totalorder %s34, 0
      %p485 = por %p483, %p484
      %p486 = scmp.ne.s32.totalorder %s472, %s473
      %p487 = scmp.eq.s32.totalorder %s35, 1
      %p488 = por %p486, %p487
      %p490 = scmp.ne.s32.totalorder %s473, %s489
      %p491 = scmp.eq.s32.totalorder %s35, 0
      %p492 = por %p490, %p491
      %p493 = scmp.le.s32.totalorder 1, %s29
      %p494 = scmp.lt.s32.totalorder %s29, 3
      %p495 = pnand %p493, %p494
      %p496 = pneg %p495
      // Predicated region
      $region9: #{classifier_net_forward.1} parent=5 // pred_check
        _
      $region10: #{classifier_net_forward.1} parent=5 // pred_check_branch
        %498 = sbr.rel (%p495) target = $region12
      $region11: #{classifier_net_forward.1} parent=5 // pred_region
        %s499 = ssub.s32 %s29, 1
        // Predicated region
        $region13: #{classifier_net_forward.1} parent=11 // pred_check
          %p500 = pneg %p102
        $region14: #{classifier_net_forward.1} parent=11 // pred_check_branch
          %502 = sbr.rel (%p500) target = $region16
        $region15: #{classifier_net_forward.1} parent=11 // pred_region
          _
        $region16: #{classifier_net_forward.1} parent=11 // pred_fallthru
          _
        // Predicated region
        $region17: #{classifier_net_forward.1} parent=11 // pred_check
          %p503 = pneg %p123
        $region18: #{classifier_net_forward.1} parent=11 // pred_check_branch
          %505 = sbr.rel (%p503) target = $region20
        $region19: #{classifier_net_forward.1} parent=11 // pred_region
          _
        $region20: #{classifier_net_forward.1} parent=11 // pred_fallthru
          _
        // Predicated region
        $region21: #{classifier_net_forward.1} parent=11 // pred_check
          %p506 = pneg %p144
        $region22: #{classifier_net_forward.1} parent=11 // pred_check_branch
          %508 = sbr.rel (%p506) target = $region24
        $region23: #{classifier_net_forward.1} parent=11 // pred_region
          _
        $region24: #{classifier_net_forward.1} parent=11 // pred_fallthru
          _
        // Predicated region
        $region25: #{classifier_net_forward.1} parent=11 // pred_check
          %p509 = pneg %p165
        $region26: #{classifier_net_forward.1} parent=11 // pred_check_branch
          %511 = sbr.rel (%p509) target = $region28
        $region27: #{classifier_net_forward.1} parent=11 // pred_region
          _
        $region28: #{classifier_net_forward.1} parent=11 // pred_fallthru
          _
        // Predicated region
        $region29: #{classifier_net_forward.1} parent=11 // pred_check
          %p512 = pneg %p186
        $region30: #{classifier_net_forward.1} parent=11 // pred_check_branch
          %514 = sbr.rel (%p512) target = $region32
        $region31: #{classifier_net_forward.1} parent=11 // pred_region
          _
        $region32: #{classifier_net_forward.1} parent=11 // pred_fallthru
          _
        // Predicated region
        $region33: #{classifier_net_forward.1} parent=11 // pred_check
          %p515 = pneg %p207
        $region34: #{classifier_net_forward.1} parent=11 // pred_check_branch
          %517 = sbr.rel (%p515) target = $region36
        $region35: #{classifier_net_forward.1} parent=11 // pred_region
          _
        $region36: #{classifier_net_forward.1} parent=11 // pred_fallthru
          _
        // Predicated region
        $region37: #{classifier_net_forward.1} parent=11 // pred_check
          %p518 = pneg %p228
        $region38: #{classifier_net_forward.1} parent=11 // pred_check_branch
          %520 = sbr.rel (%p518) target = $region40
        $region39: #{classifier_net_forward.1} parent=11 // pred_region
          _
        $region40: #{classifier_net_forward.1} parent=11 // pred_fallthru
          _
        // Predicated region
        $region41: #{classifier_net_forward.1} parent=11 // pred_check
          %p521 = pneg %p249
        $region42: #{classifier_net_forward.1} parent=11 // pred_check_branch
          %523 = sbr.rel (%p521) target = $region44
        $region43: #{classifier_net_forward.1} parent=11 // pred_region
          _
        $region44: #{classifier_net_forward.1} parent=11 // pred_fallthru
          _
        // Predicated region
        $region45: #{classifier_net_forward.1} parent=11 // pred_check
          %p524 = pneg %p270
        $region46: #{classifier_net_forward.1} parent=11 // pred_check_branch
          %526 = sbr.rel (%p524) target = $region48
        $region47: #{classifier_net_forward.1} parent=11 // pred_region
          _
        $region48: #{classifier_net_forward.1} parent=11 // pred_fallthru
          _
        // Predicated region
        $region49: #{classifier_net_forward.1} parent=11 // pred_check
          %p527 = pneg %p291
        $region50: #{classifier_net_forward.1} parent=11 // pred_check_branch
          %529 = sbr.rel (%p527) target = $region52
        $region51: #{classifier_net_forward.1} parent=11 // pred_region
          _
        $region52: #{classifier_net_forward.1} parent=11 // pred_fallthru
          _
        // Predicated region
        $region53: #{classifier_net_forward.1} parent=11 // pred_check
          %p530 = pneg %p312
        $region54: #{classifier_net_forward.1} parent=11 // pred_check_branch
          %532 = sbr.rel (%p530) target = $region56
        $region55: #{classifier_net_forward.1} parent=11 // pred_region
          _
        $region56: #{classifier_net_forward.1} parent=11 // pred_fallthru
          _
        // Predicated region
        $region57: #{classifier_net_forward.1} parent=11 // pred_check
          %p533 = pneg %p333
        $region58: #{classifier_net_forward.1} parent=11 // pred_check_branch
          %535 = sbr.rel (%p533) target = $region60
        $region59: #{classifier_net_forward.1} parent=11 // pred_region
          _
        $region60: #{classifier_net_forward.1} parent=11 // pred_fallthru
          _
        // Predicated region
        $region61: #{classifier_net_forward.1} parent=11 // pred_check
          %p536 = pneg %p354
        $region62: #{classifier_net_forward.1} parent=11 // pred_check_branch
          %538 = sbr.rel (%p536) target = $region64
        $region63: #{classifier_net_forward.1} parent=11 // pred_region
          _
        $region64: #{classifier_net_forward.1} parent=11 // pred_fallthru
          _
        // Predicated region
        $region65: #{classifier_net_forward.1} parent=11 // pred_check
          %p539 = pneg %p375
        $region66: #{classifier_net_forward.1} parent=11 // pred_check_branch
          %541 = sbr.rel (%p539) target = $region68
        $region67: #{classifier_net_forward.1} parent=11 // pred_region
          _
        $region68: #{classifier_net_forward.1} parent=11 // pred_fallthru
          _
        // Predicated region
        $region69: #{classifier_net_forward.1} parent=11 // pred_check
          %p542 = pneg %p396
        $region70: #{classifier_net_forward.1} parent=11 // pred_check_branch
          %544 = sbr.rel (%p542) target = $region72
        $region71: #{classifier_net_forward.1} parent=11 // pred_region
          _
        $region72: #{classifier_net_forward.1} parent=11 // pred_fallthru
          _
        // Predicated region
        $region73: #{classifier_net_forward.1} parent=11 // pred_check
          %p545 = pneg %p417
        $region74: #{classifier_net_forward.1} parent=11 // pred_check_branch
          %547 = sbr.rel (%p545) target = $region76
        $region75: #{classifier_net_forward.1} parent=11 // pred_region
          _
        $region76: #{classifier_net_forward.1} parent=11 // pred_fallthru
          _
        // Predicated region
        $region77: #{classifier_net_forward.1} parent=11 // pred_check
          %p548 = pneg %p438
        $region78: #{classifier_net_forward.1} parent=11 // pred_check_branch
          %550 = sbr.rel (%p548) target = $region80
        $region79: #{classifier_net_forward.1} parent=11 // pred_region
          _
        $region80: #{classifier_net_forward.1} parent=11 // pred_fallthru
          _
        // Predicated region
        $region81: #{classifier_net_forward.1} parent=11 // pred_check
          %p551 = pneg %p459
        $region82: #{classifier_net_forward.1} parent=11 // pred_check_branch
          %553 = sbr.rel (%p551) target = $region84
        $region83: #{classifier_net_forward.1} parent=11 // pred_region
          _
        $region84: #{classifier_net_forward.1} parent=11 // pred_fallthru
          _
      $region12: #{classifier_net_forward.1} parent=5 // pred_fallthru
        _
      %p554 = scmp.lt.s32.totalorder %s29, 2
      // Predicated region
      $region85: #{classifier_net_forward.1} parent=5 // pred_check
        %p555 = pneg %p554
      $region86: #{classifier_net_forward.1} parent=5 // pred_check_branch
        %557 = sbr.rel (%p555) target = $region88
      $region87: #{classifier_net_forward.1} parent=5 // pred_region
        // Predicated region
        $region89: #{classifier_net_forward.1} parent=87 // pred_check
          %p558 = pneg %p49
        $region90: #{classifier_net_forward.1} parent=87 // pred_check_branch
          %560 = sbr.rel (%p558) target = $region92
        $region91: #{classifier_net_forward.1} parent=87 // pred_region
          %p561 = scmp.lt.s32.totalorder %s29, 1
          %s562 = scalar_select %p561, %s29, 1
          %s563 = smul.addr %s562, 8
          %s564 = scalar_lea.vmem %s0, %s563
        $region92: #{classifier_net_forward.1} parent=87 // pred_fallthru
          _
        // Predicated region
        $region93: #{classifier_net_forward.1} parent=87 // pred_check
          %p565 = pneg %p75
        $region94: #{classifier_net_forward.1} parent=87 // pred_check_branch
          %567 = sbr.rel (%p565) target = $region96
        $region95: #{classifier_net_forward.1} parent=87 // pred_region
          %p568 = scmp.lt.s32.totalorder %s29, 1
          %s569 = scalar_select %p568, %s29, 1
          %s570 = scalar_lea.vmem %s1, %s569
        $region96: #{classifier_net_forward.1} parent=87 // pred_fallthru
          _
      $region88: #{classifier_net_forward.1} parent=5 // pred_fallthru
        _
      %p571 = scmp.le.s32.totalorder 1, %s29
      %p572 = scmp.lt.s32.totalorder %s29, 3
      %p573 = pnand %p571, %p572
      %p574 = pneg %p573
      // Predicated region
      $region97: #{classifier_net_forward.1} parent=5 // pred_check
        _
      $region98: #{classifier_net_forward.1} parent=5 // pred_check_branch
        %576 = sbr.rel (%p573) target = $region100
      $region99: #{classifier_net_forward.1} parent=5 // pred_region
        %s577 = ssub.s32 %s29, 1
        %p578 = scmp.lt.s32.totalorder %s34, 1
        %s579 = scalar_select %p578, %s34, 1
        %s580 = smul.addr %s579, 8
        %s581 = scalar_lea.vmem %s0, %s580
        %p582 = pneg %p55
        %p583 = pneg %p52
        %p584 = scmp.lt.s32.totalorder %s34, 1
        %s585 = scalar_select %p584, %s34, 1
        %s586 = scalar_lea.vmem %s1, %s585
        %p587 = pneg %p81
        %p588 = pneg %p78
        %p589 = pneg %p102
        %p590 = pneg %p99
        %p591 = pneg %p123
        %p592 = pneg %p120
        %p593 = pneg %p144
        %p594 = pneg %p141
        %p595 = pneg %p165
        %p596 = pneg %p162
        %p597 = pneg %p186
        %p598 = pneg %p183
        %p599 = pneg %p207
        %p600 = pneg %p204
        %p601 = pneg %p228
        %p602 = pneg %p225
        %p603 = pneg %p249
        %p604 = pneg %p246
        %p605 = pneg %p270
        %p606 = pneg %p267
        %p607 = pneg %p291
        %p608 = pneg %p288
        %p609 = pneg %p312
        %p610 = pneg %p309
        %p611 = pneg %p333
        %p612 = pneg %p330
        %p613 = pneg %p354
        %p614 = pneg %p351
        %p615 = pneg %p375
        %p616 = pneg %p372
        %p617 = pneg %p396
        %p618 = pneg %p393
        %p619 = pneg %p417
        %p620 = pneg %p414
        %p621 = pneg %p438
        %p622 = pneg %p435
        %p623 = pneg %p459
        %p624 = pneg %p456
        %p625 = pneg %p485
        %p626 = pneg %p482
        %s627 = sand.u32 %s472, 1
        %s628 = scalar_lea.sflag [#allocation3], %s627
        %s629 = sand.u32 %s472, 1
        %s630 = scalar_lea.vmem [#allocation2], %s629
        %p631 = scmp.lt.s32.totalorder %s34, 1
        %s632 = scalar_select %p631, %s34, 1
        %s633 = smul.addr %s632, 8
        %s634 = scalar_lea.vmem %s0, %s633
        %p635 = scmp.lt.s32.totalorder %s34, 1
        %s636 = scalar_select %p635, %s34, 1
        %s637 = scalar_lea.vmem %s1, %s636
        %v639 = vld [vmem:[%s634] sm:$0xff]
        %v640 = vld [vmem:[%s2] sm:$0x1]
        %v641 = vld [vmem:[%s3] sm:$0x1]
        %642 = vadd.xlane.f32.xlu0 %v639
        %v643 = vpop.xlane.xlu0 %642
        %v644 = vrcp.pop 128.0
        %v645 = vmul.f32 %v643, %v644
        %v646 = vsub.f32 %v639, %v645
        %v647 = vmul.f32 %v646, %v646
        %648 = vadd.xlane.f32.xlu0 %v647
        %v649 = vpop.xlane.xlu0 %648
        %v650 = vmul.f32 %v649, %v644
        %v651 = vadd.f32 %v650, 1e-12
        %v652 = vrsqrt.pop %v651
        %v653 = vmul.f32 %v646, %v652
        %v655 = vlaneseq
        %v656 = vshrl.u32 %v655, 7
        %v657 = vsub.s32 0, %v656
        %v658 = vrot.slane %v640, %v657
        %v660 = vmul.f32 %v653, %v658
        %v662 = vlaneseq
        %v663 = vshrl.u32 %v662, 7
        %v664 = vsub.s32 0, %v663
        %v665 = vrot.slane %v641, %v664
        %v667 = vadd.f32 %v660, %v665
        %v668 = vpack.c.bf16 %v667, %v667
        %v669 = vld [vmem:[%s4] sm:$0xff]
        %v670 = vld [vmem:[%s4 + $0x8] sm:$0xf]
        %v671 = vld [vmem:[%s4 + $0xc] sm:$0xff]
        %v672 = vld [vmem:[%s4 + $0x14] sm:$0xf]
        %v673 = vld [vmem:[%s4 + $0x18] sm:$0xff]
        %v674 = vld [vmem:[%s4 + $0x20] sm:$0xf]
        %v675 = vld [vmem:[%s4 + $0x24] sm:$0xff]
        %v676 = vld [vmem:[%s4 + $0x2c] sm:$0xf]
        %v677 = vld [vmem:[%s4 + $0x30] sm:$0xff]
        %v678 = vld [vmem:[%s4 + $0x38] sm:$0xf]
        %v679 = vld [vmem:[%s4 + $0x3c] sm:$0xff]
        %v680 = vld [vmem:[%s4 + $0x44] sm:$0xf]
        %v681 = vld [vmem:[%s4 + $0x48] sm:$0xff]
        %v682 = vld [vmem:[%s4 + $0x50] sm:$0xf]
        %v683 = vld [vmem:[%s4 + $0x54] sm:$0xff]
        %v684 = vld [vmem:[%s4 + $0x5c] sm:$0xf]
        %v685 = vld [vmem:[%s4 + $0x60] sm:$0xff]
        %v686 = vld [vmem:[%s4 + $0x68] sm:$0xf]
        %v687 = vld [vmem:[%s4 + $0x6c] sm:$0xff]
        %v688 = vld [vmem:[%s4 + $0x74] sm:$0xf]
        %v689 = vld [vmem:[%s4 + $0x78] sm:$0xff]
        %v690 = vld [vmem:[%s4 + $0x80] sm:$0xf]
        %v691 = vld [vmem:[%s4 + $0x84] sm:$0xff]
        %v692 = vld [vmem:[%s4 + $0x8c] sm:$0xf]
        %v693 = vld [vmem:[%s4 + $0x90] sm:$0xff]
        %v694 = vld [vmem:[%s4 + $0x98] sm:$0xf]
        %v695 = vld [vmem:[%s4 + $0x9c] sm:$0xff]
        %v696 = vld [vmem:[%s4 + $0xa4] sm:$0xf]
        %v697 = vld [vmem:[%s4 + $0xa8] sm:$0xff]
        %v698 = vld [vmem:[%s4 + $0xb0] sm:$0xf]
        %v699 = vld [vmem:[%s4 + $0xb4] sm:$0xff]
        %v700 = vld [vmem:[%s4 + $0xbc] sm:$0xf]
        %v701 = vld [vmem:[%s5] sm:$0x7]
        %v703 = vlaneseq
        %v704 = vshrl.u32 %v703, 7
        %v705 = vsub.s32 0, %v704
        %v706 = vrot.slane %v701, %v705
        %v707 = vlaneseq
        %v708 = vshrl.u32 %v707, 7
        %v709 = vsub.s32 1, %v708
        %v710 = vrot.slane %v701, %v709
        %v711 = vlaneseq
        %v712 = vshrl.u32 %v711, 7
        %v713 = vsub.s32 2, %v712
        %v714 = vrot.slane %v701, %v713
        %v750 = vunpack.c.l.b16 %v669
        %v751 = vunpack.c.h.b16 %v669
        %v752 = vunpack.c.l.b16 %v670
        %v753 = vunpack.c.l.b16 %v671
        %v754 = vunpack.c.h.b16 %v671
        %v755 = vunpack.c.l.b16 %v672
        %v756 = vunpack.c.l.b16 %v673
        %v757 = vunpack.c.h.b16 %v673
        %v758 = vunpack.c.l.b16 %v674
        %v759 = vunpack.c.l.b16 %v675
        %v760 = vunpack.c.h.b16 %v675
        %v761 = vunpack.c.l.b16 %v676
        %v762 = vunpack.c.l.b16 %v677
        %v763 = vunpack.c.h.b16 %v677
        %v764 = vunpack.c.l.b16 %v678
        %v765 = vunpack.c.l.b16 %v679
        %v766 = vunpack.c.h.b16 %v679
        %v767 = vunpack.c.l.b16 %v680
        %v768 = vunpack.c.l.b16 %v681
        %v769 = vunpack.c.h.b16 %v681
        %v770 = vunpack.c.l.b16 %v682
        %v771 = vunpack.c.l.b16 %v683
        %v772 = vunpack.c.h.b16 %v683
        %v773 = vunpack.c.l.b16 %v684
        %v774 = vunpack.c.l.b16 %v685
        %v775 = vunpack.c.h.b16 %v685
        %v776 = vunpack.c.l.b16 %v686
        %v777 = vunpack.c.l.b16 %v687
        %v778 = vunpack.c.h.b16 %v687
        %v779 = vunpack.c.l.b16 %v688
        %v780 = vunpack.c.l.b16 %v689
        %v781 = vunpack.c.h.b16 %v689
        %v782 = vunpack.c.l.b16 %v690
        %v783 = vunpack.c.l.b16 %v691
        %v784 = vunpack.c.h.b16 %v691
        %v785 = vunpack.c.l.b16 %v692
        %v786 = vunpack.c.l.b16 %v693
        %v787 = vunpack.c.h.b16 %v693
        %v788 = vunpack.c.l.b16 %v694
        %v789 = vunpack.c.l.b16 %v695
        %v790 = vunpack.c.h.b16 %v695
        %v791 = vunpack.c.l.b16 %v696
        %v792 = vunpack.c.l.b16 %v697
        %v793 = vunpack.c.h.b16 %v697
        %v794 = vunpack.c.l.b16 %v698
        %v795 = vunpack.c.l.b16 %v699
        %v796 = vunpack.c.h.b16 %v699
        %v797 = vunpack.c.l.b16 %v700
        %v798 = vpack.c.b16 %v753, %v750
        %v799 = vpack.c.b16 %v754, %v751
        %v800 = vpack.c.b16 %v755, %v752
        %v801 = vpack.c.b16 %v759, %v756
        %v802 = vpack.c.b16 %v760, %v757
        %v803 = vpack.c.b16 %v761, %v758
        %v804 = vpack.c.b16 %v765, %v762
        %v805 = vpack.c.b16 %v766, %v763
        %v806 = vpack.c.b16 %v767, %v764
        %v807 = vpack.c.b16 %v771, %v768
        %v808 = vpack.c.b16 %v772, %v769
        %v809 = vpack.c.b16 %v773, %v770
        %v810 = vpack.c.b16 %v777, %v774
        %v811 = vpack.c.b16 %v778, %v775
        %v812 = vpack.c.b16 %v779, %v776
        %v813 = vpack.c.b16 %v783, %v780
        %v814 = vpack.c.b16 %v784, %v781
        %v815 = vpack.c.b16 %v785, %v782
        %v816 = vpack.c.b16 %v789, %v786
        %v817 = vpack.c.b16 %v790, %v787
        %v818 = vpack.c.b16 %v791, %v788
        %v819 = vpack.c.b16 %v795, %v792
        %v820 = vpack.c.b16 %v796, %v793
        %v821 = vpack.c.b16 %v797, %v794
        %846 = vmatprep.subr.bf16.mxu0 %v820
        %847 = vmatpush1.bf16.msra.mxu0 %v819
        %848 = vmatprep.subr.bf16.mxu0 %v817
        %849 = vmatpush1.bf16.msra.mxu0 %v816
        %850 = vmatprep.subr.bf16.mxu0 %v814
        %851 = vmatpush1.bf16.msra.mxu0 %v813
        %852 = vmatprep.subr.bf16.mxu0 %v811
        %853 = vmatpush1.bf16.msra.mxu0 %v810
        %854 = vmatprep.subr.bf16.mxu0 %v808
        %855 = vmatpush1.bf16.msra.mxu0 %v807
        %856 = vmatprep.subr.bf16.mxu0 %v805
        %857 = vmatpush1.bf16.msra.mxu0 %v804
        %858 = vmatprep.subr.bf16.mxu0 %v802
        %859 = vmatpush1.bf16.msra.mxu0 %v801
        %860 = vmatprep.subr.bf16.mxu0 %v799
        %861 = vmatpush1.bf16.msra.mxu0 %v798
        %862 = vmatprep.subr.bf16.mxu0 0
        %863 = vmatpush2.bf16.msra.mxu0 0
        %864 = vmatprep.subr.bf16.mxu0 0
        %865 = vmatpush2.bf16.msra.mxu0 0
        %866 = vmatprep.subr.bf16.mxu0 0
        %867 = vmatpush2.bf16.msra.mxu0 0
        %868 = vmatprep.subr.bf16.mxu0 0
        %869 = vmatpush2.bf16.msra.mxu0 0
        %870 = vmatprep.subr.bf16.mxu0 0
        %871 = vmatpush2.bf16.msra.mxu0 0
        %872 = vmatprep.subr.bf16.mxu0 0
        %873 = vmatpush2.bf16.msra.mxu0 0
        %874 = vmatprep.subr.bf16.mxu0 0
        %875 = vmatpush2.bf16.msra.mxu0 0
        %876 = vmatprep.subr.bf16.mxu0 0
        %877 = vmatpush2.bf16.msra.mxu0 0
        %878 = vmatprep.mubr.bf16.mxu0 0
        %879 = vmatmul.mubr.bf16.gmra.mxu0 %v668
        %v880 = vpop.f32.mrf.mxu0
        %v881 = vadd.f32 %v706, %v880
        %v882 = vpop.f32.mrf.mxu0
        %v883 = vadd.f32 %v710, %v882
        %v884 = vpop.f32.mrf.mxu0
        %v885 = vpop.f32.mrf.mxu0
        %886 = vdwg.mxu0
        %887 = vmatprep.subr.bf16.mxu0 0
        %888 = vmatpush1.bf16.msra.mxu0 %v821
        %889 = vmatprep.subr.bf16.mxu0 0
        %890 = vmatpush1.bf16.msra.mxu0 %v818
        %891 = vmatprep.subr.bf16.mxu0 0
        %892 = vmatpush1.bf16.msra.mxu0 %v815
        %893 = vmatprep.subr.bf16.mxu0 0
        %894 = vmatpush1.bf16.msra.mxu0 %v812
        %895 = vmatprep.subr.bf16.mxu0 0
        %896 = vmatpush1.bf16.msra.mxu0 %v809
        %897 = vmatprep.subr.bf16.mxu0 0
        %898 = vmatpush1.bf16.msra.mxu0 %v806
        %899 = vmatprep.subr.bf16.mxu0 0
        %900 = vmatpush1.bf16.msra.mxu0 %v803
        %901 = vmatprep.subr.bf16.mxu0 0
        %902 = vmatpush1.bf16.msra.mxu0 %v800
        %903 = vmatprep.subr.bf16.mxu0 0
        %904 = vmatpush2.bf16.msra.mxu0 0
        %905 = vmatprep.subr.bf16.mxu0 0
        %906 = vmatpush2.bf16.msra.mxu0 0
        %907 = vmatprep.subr.bf16.mxu0 0
        %908 = vmatpush2.bf16.msra.mxu0 0
        %909 = vmatprep.subr.bf16.mxu0 0
        %910 = vmatpush2.bf16.msra.mxu0 0
        %911 = vmatprep.subr.bf16.mxu0 0
        %912 = vmatpush2.bf16.msra.mxu0 0
        %913 = vmatprep.subr.bf16.mxu0 0
        %914 = vmatpush2.bf16.msra.mxu0 0
        %915 = vmatprep.subr.bf16.mxu0 0
        %916 = vmatpush2.bf16.msra.mxu0 0
        %917 = vmatprep.subr.bf16.mxu0 0
        %918 = vmatpush2.bf16.msra.mxu0 0
        %919 = vmatprep.mubr.bf16.mxu0 0
        %920 = vmatmul.mubr.bf16.gmra.mxu0 %v668
        %v921 = vpop.f32.mrf.mxu0
        %v922 = vadd.f32 %v714, %v921
        %v923 = vpop.f32.mrf.mxu0
        %v924 = vpop.f32.mrf.mxu0
        %v925 = vpop.f32.mrf.mxu0
        %926 = vdwg.mxu0
        %v927 = vld [vmem:[%s637] sm:$0x1]
        %v928 = vlaneseq
        %v929 = vand.u32 %v928, 127
        %vm930 = vcmp.ge.s32.totalorder %v929, 0
        %vm931 = vcmp.lt.s32.totalorder %v929, 64
        %vm932 = vmand %vm930, %vm931
        %v933 = vsel %vm932, 1, 0
        %v934 = vcvt.s32.f32 %v933
        %v935 = vmul.f32 %v881, %v934
        %v936 = vpack.c.bf16 %v935, %v935
        %v937 = vpack.c.bf16 %v883, %v883
        %938 = vmatprep.subr.bf16.mxu0 0
        %939 = vmatpush1.bf16.xpose.msra.mxu0 0
        %940 = vmatprep.subr.bf16.mxu0 0
        %941 = vmatpush1.bf16.xpose.msra.mxu0 0
        %942 = vmatprep.subr.bf16.mxu0 0
        %943 = vmatpush1.bf16.xpose.msra.mxu0 0
        %944 = vmatprep.subr.bf16.mxu0 0
        %945 = vmatpush1.bf16.xpose.msra.mxu0 0
        %946 = vmatprep.subr.bf16.mxu0 0
        %947 = vmatpush1.bf16.xpose.msra.mxu0 0
        %948 = vmatprep.subr.bf16.mxu0 0
        %949 = vmatpush1.bf16.xpose.msra.mxu0 0
        %950 = vmatprep.subr.bf16.mxu0 0
        %951 = vmatpush1.bf16.xpose.msra.mxu0 0
        %952 = vmatprep.subr.bf16.mxu0 0
        %953 = vmatpush1.bf16.xpose.msra.mxu0 %v937
        %954 = vmatprep.subr.bf16.mxu0 0
        %955 = vmatpush2.bf16.xpose.msra.mxu0 0
        %956 = vmatprep.subr.bf16.mxu0 0
        %957 = vmatpush2.bf16.xpose.msra.mxu0 0
        %958 = vmatprep.subr.bf16.mxu0 0
        %959 = vmatpush2.bf16.xpose.msra.mxu0 0
        %960 = vmatprep.subr.bf16.mxu0 0
        %961 = vmatpush2.bf16.xpose.msra.mxu0 0
        %962 = vmatprep.subr.bf16.mxu0 0
        %963 = vmatpush2.bf16.xpose.msra.mxu0 0
        %964 = vmatprep.subr.bf16.mxu0 0
        %965 = vmatpush2.bf16.xpose.msra.mxu0 0
        %966 = vmatprep.subr.bf16.mxu0 0
        %967 = vmatpush2.bf16.xpose.msra.mxu0 0
        %968 = vmatprep.subr.bf16.mxu0 0
        %969 = vmatpush2.bf16.xpose.msra.mxu0 0
        %970 = vmatprep.mubr.bf16.mxu0 0
        %971 = vmatmul.mubr.bf16.gmra.mxu0 %v936
        %v972 = vpop.f32.mrf.mxu0
        %v973 = vadd.f32 0.0, %v972
        %v974 = vpop.f32.mrf.mxu0
        %v975 = vpop.f32.mrf.mxu0
        %v976 = vpop.f32.mrf.mxu0
        %977 = vdwg.mxu0
        %v978 = vmul.f32 %v973, 0.125
        %v980 = vlaneseq
        %v981 = vshrl.u32 %v980, 7
        %v982 = vsub.s32 0, %v981
        %v983 = vrot.slane %v927, %v982
        %v985 = vadd.f32 %v978, %v983
        %vm986 = vcmask 64512
        %v987 = vsel %vm986, %v985, -inf
        %988 = vmax.xlane.f32.xlu0 %v987
        %v989 = vpop.xlane.xlu0 %988
        %v990 = vsub.f32 %v985, %v989
        %v991 = vmul.f32 %v990, 1.442695
        %v992 = vpow.pop %v991
        %v993 = vsel %vm986, %v992, 0.0
        %994 = vadd.xlane.f32.xlu0 %v993
        %v995 = vpop.xlane.xlu0 %994
        %v996 = vrcp.pop %v995
        %v997 = vmul.f32 %v992, %v996
        %v998 = vpack.c.bf16 %v997, %v997
        %v999 = vpack.c.bf16 %v922, %v922
        %v1001 = vsel %vm986, %v998, 0
        %vm1003 = vcmask 1043456
        %v1005 = vsel %vm1003, %v999, 0
        %1007 = vmatprep.subr.bf16.mxu0 0
        %1008 = vmatpush1.bf16.msra.mxu0 0
        %1009 = vmatprep.subr.bf16.mxu0 0
        %1010 = vmatpush1.bf16.msra.mxu0 0
        %1011 = vmatprep.subr.bf16.mxu0 0
        %1012 = vmatpush1.bf16.msra.mxu0 0
        %1013 = vmatprep.subr.bf16.mxu0 0
        %1014 = vmatpush1.bf16.msra.mxu0 0
        %1015 = vmatprep.subr.bf16.mxu0 0
        %1016 = vmatpush1.bf16.msra.mxu0 0
        %1017 = vmatprep.subr.bf16.mxu0 0
        %1018 = vmatpush1.bf16.msra.mxu0 0
        %1019 = vmatprep.subr.bf16.mxu0 0
        %1020 = vmatpush1.bf16.msra.mxu0 0
        %1021 = vmatprep.subr.bf16.mxu0 0
        %1022 = vmatpush1.bf16.msra.mxu0 %v1005
        %1023 = vmatprep.subr.bf16.mxu0 0
        %1024 = vmatpush2.bf16.msra.mxu0 0
        %1025 = vmatprep.subr.bf16.mxu0 0
        %1026 = vmatpush2.bf16.msra.mxu0 0
        %1027 = vmatprep.subr.bf16.mxu0 0
        %1028 = vmatpush2.bf16.msra.mxu0 0
        %1029 = vmatprep.subr.bf16.mxu0 0
        %1030 = vmatpush2.bf16.msra.mxu0 0
        %1031 = vmatprep.subr.bf16.mxu0 0
        %1032 = vmatpush2.bf16.msra.mxu0 0
        %1033 = vmatprep.subr.bf16.mxu0 0
        %1034 = vmatpush2.bf16.msra.mxu0 0
        %1035 = vmatprep.subr.bf16.mxu0 0
        %1036 = vmatpush2.bf16.msra.mxu0 0
        %1037 = vmatprep.subr.bf16.mxu0 0
        %1038 = vmatpush2.bf16.msra.mxu0 0
        %1039 = vmatprep.mubr.bf16.mxu0 0
        %1040 = vmatmul.mubr.bf16.gmra.mxu0 %v1001
        %v1041 = vpop.f32.mrf.mxu0
        %v1042 = vadd.f32 0.0, %v1041
        %v1043 = vpop.f32.mrf.mxu0
        %v1044 = vpop.f32.mrf.mxu0
        %v1045 = vpop.f32.mrf.mxu0
        %1046 = vdwg.mxu0
        %v1047 = vmul.f32 %v1042, %v934
        %v1048 = vadd.f32 %v1047, 0.0
        %vm1049 = vcmp.ge.s32.totalorder %v929, 64
        %vm1050 = vcmp.lt.s32.totalorder %v929, 128
        %vm1051 = vmand %vm1049, %vm1050
        %v1052 = vsel %vm1051, 1, 0
        %v1053 = vcvt.s32.f32 %v1052
        %v1054 = vmul.f32 %v881, %v1053
        %v1055 = vpack.c.bf16 %v1054, %v1054
        %1056 = vmatprep.subr.bf16.mxu0 0
        %1057 = vmatpush1.bf16.xpose.msra.mxu0 0
        %1058 = vmatprep.subr.bf16.mxu0 0
        %1059 = vmatpush1.bf16.xpose.msra.mxu0 0
        %1060 = vmatprep.subr.bf16.mxu0 0
        %1061 = vmatpush1.bf16.xpose.msra.mxu0 0
        %1062 = vmatprep.subr.bf16.mxu0 0
        %1063 = vmatpush1.bf16.xpose.msra.mxu0 0
        %1064 = vmatprep.subr.bf16.mxu0 0
        %1065 = vmatpush1.bf16.xpose.msra.mxu0 0
        %1066 = vmatprep.subr.bf16.mxu0 0
        %1067 = vmatpush1.bf16.xpose.msra.mxu0 0
        %1068 = vmatprep.subr.bf16.mxu0 0
        %1069 = vmatpush1.bf16.xpose.msra.mxu0 0
        %1070 = vmatprep.subr.bf16.mxu0 0
        %1071 = vmatpush1.bf16.xpose.msra.mxu0 %v937
        %1072 = vmatprep.subr.bf16.mxu0 0
        %1073 = vmatpush2.bf16.xpose.msra.mxu0 0
        %1074 = vmatprep.subr.bf16.mxu0 0
        %1075 = vmatpush2.bf16.xpose.msra.mxu0 0
        %1076 = vmatprep.subr.bf16.mxu0 0
        %1077 = vmatpush2.bf16.xpose.msra.mxu0 0
        %1078 = vmatprep.subr.bf16.mxu0 0
        %1079 = vmatpush2.bf16.xpose.msra.mxu0 0
        %1080 = vmatprep.subr.bf16.mxu0 0
        %1081 = vmatpush2.bf16.xpose.msra.mxu0 0
        %1082 = vmatprep.subr.bf16.mxu0 0
        %1083 = vmatpush2.bf16.xpose.msra.mxu0 0
        %1084 = vmatprep.subr.bf16.mxu0 0
        %1085 = vmatpush2.bf16.xpose.msra.mxu0 0
        %1086 = vmatprep.subr.bf16.mxu0 0
        %1087 = vmatpush2.bf16.xpose.msra.mxu0 0
        %1088 = vmatprep.mubr.bf16.mxu0 0
        %1089 = vmatmul.mubr.bf16.gmra.mxu0 %v1055
        %v1090 = vpop.f32.mrf.mxu0
        %v1091 = vadd.f32 0.0, %v1090
        %v1092 = vpop.f32.mrf.mxu0
        %v1093 = vpop.f32.mrf.mxu0
        %v1094 = vpop.f32.mrf.mxu0
        %1095 = vdwg.mxu0
        %v1096 = vmul.f32 %v1091, 0.125
        %v1097 = vadd.f32 %v1096, %v983
        %v1098 = vsel %vm986, %v1097, -inf
        %1099 = vmax.xlane.f32.xlu0 %v1098
        %v1100 = vpop.xlane.xlu0 %1099
        %v1101 = vsub.f32 %v1097, %v1100
        %v1102 = vmul.f32 %v1101, 1.442695
        %v1103 = vpow.pop %v1102
        %v1104 = vsel %vm986, %v1103, 0.0
        %1105 = vadd.xlane.f32.xlu0 %v1104
        %v1106 = vpop.xlane.xlu0 %1105
        %v1107 = vrcp.pop %v1106
        %v1108 = vmul.f32 %v1103, %v1107
        %v1109 = vpack.c.bf16 %v1108, %v1108
        %v1111 = vsel %vm986, %v1109, 0
        %1113 = vmatprep.subr.bf16.mxu0 0
        %1114 = vmatpush1.bf16.msra.mxu0 0
        %1115 = vmatprep.subr.bf16.mxu0 0
        %1116 = vmatpush1.bf16.msra.mxu0 0
        %1117 = vmatprep.subr.bf16.mxu0 0
        %1118 = vmatpush1.bf16.msra.mxu0 0
        %1119 = vmatprep.subr.bf16.mxu0 0
        %1120 = vmatpush1.bf16.msra.mxu0 0
        %1121 = vmatprep.subr.bf16.mxu0 0
        %1122 = vmatpush1.bf16.msra.mxu0 0
        %1123 = vmatprep.subr.bf16.mxu0 0
        %1124 = vmatpush1.bf16.msra.mxu0 0
        %1125 = vmatprep.subr.bf16.mxu0 0
        %1126 = vmatpush1.bf16.msra.mxu0 0
        %1127 = vmatprep.subr.bf16.mxu0 0
        %1128 = vmatpush1.bf16.msra.mxu0 %v1005
        %1129 = vmatprep.subr.bf16.mxu0 0
        %1130 = vmatpush2.bf16.msra.mxu0 0
        %1131 = vmatprep.subr.bf16.mxu0 0
        %1132 = vmatpush2.bf16.msra.mxu0 0
        %1133 = vmatprep.subr.bf16.mxu0 0
        %1134 = vmatpush2.bf16.msra.mxu0 0
        %1135 = vmatprep.subr.bf16.mxu0 0
        %1136 = vmatpush2.bf16.msra.mxu0 0
        %1137 = vmatprep.subr.bf16.mxu0 0
        %1138 = vmatpush2.bf16.msra.mxu0 0
        %1139 = vmatprep.subr.bf16.mxu0 0
        %1140 = vmatpush2.bf16.msra.mxu0 0
        %1141 = vmatprep.subr.bf16.mxu0 0
        %1142 = vmatpush2.bf16.msra.mxu0 0
        %1143 = vmatprep.subr.bf16.mxu0 0
        %1144 = vmatpush2.bf16.msra.mxu0 0
        %1145 = vmatprep.mubr.bf16.mxu0 0
        %1146 = vmatmul.mubr.bf16.gmra.mxu0 %v1111
        %v1147 = vpop.f32.mrf.mxu0
        %v1148 = vadd.f32 0.0, %v1147
        %v1149 = vpop.f32.mrf.mxu0
        %v1150 = vpop.f32.mrf.mxu0
        %v1151 = vpop.f32.mrf.mxu0
        %1152 = vdwg.mxu0
        %v1153 = vmul.f32 %v1148, %v1053
        %v1154 = vadd.f32 %v1048, %v1153
        %v1155 = vpack.c.bf16 %v1154, %v1154
        %v1156 = vld [vmem:[%s6] sm:$0xf]
        %v1157 = vld [vmem:[%s6 + $0x4] sm:$0xf]
        %v1158 = vld [vmem:[%s6 + $0x8] sm:$0xf]
        %v1159 = vld [vmem:[%s6 + $0xc] sm:$0xf]
        %v1160 = vld [vmem:[%s6 + $0x10] sm:$0xf]
        %v1161 = vld [vmem:[%s6 + $0x14] sm:$0xf]
        %v1162 = vld [vmem:[%s6 + $0x18] sm:$0xf]
        %v1163 = vld [vmem:[%s6 + $0x1c] sm:$0xf]
        %v1164 = vld [vmem:[%s6 + $0x20] sm:$0xf]
        %v1165 = vld [vmem:[%s6 + $0x24] sm:$0xf]
        %v1166 = vld [vmem:[%s6 + $0x28] sm:$0xf]
        %v1167 = vld [vmem:[%s6 + $0x2c] sm:$0xf]
        %v1168 = vld [vmem:[%s6 + $0x30] sm:$0xf]
        %v1169 = vld [vmem:[%s6 + $0x34] sm:$0xf]
        %v1170 = vld [vmem:[%s6 + $0x38] sm:$0xf]
        %v1171 = vld [vmem:[%s6 + $0x3c] sm:$0xf]
        %v1172 = vld [vmem:[%s7] sm:$0x1]
        %v1174 = vlaneseq
        %v1175 = vshrl.u32 %v1174, 7
        %v1176 = vsub.s32 0, %v1175
        %v1177 = vrot.slane %v1172, %v1176
        %v1195 = vunpack.c.l.b16 %v1156
        %v1196 = vunpack.c.l.b16 %v1157
        %v1197 = vunpack.c.l.b16 %v1158
        %v1198 = vunpack.c.l.b16 %v1159
        %v1199 = vunpack.c.l.b16 %v1160
        %v1200 = vunpack.c.l.b16 %v1161
        %v1201 = vunpack.c.l.b16 %v1162
        %v1202 = vunpack.c.l.b16 %v1163
        %v1203 = vunpack.c.l.b16 %v1164
        %v1204 = vunpack.c.l.b16 %v1165
        %v1205 = vunpack.c.l.b16 %v1166
        %v1206 = vunpack.c.l.b16 %v1167
        %v1207 = vunpack.c.l.b16 %v1168
        %v1208 = vunpack.c.l.b16 %v1169
        %v1209 = vunpack.c.l.b16 %v1170
        %v1210 = vunpack.c.l.b16 %v1171
        %v1211 = vpack.c.b16 %v1196, %v1195
        %v1212 = vpack.c.b16 %v1198, %v1197
        %v1213 = vpack.c.b16 %v1200, %v1199
        %v1214 = vpack.c.b16 %v1202, %v1201
        %v1215 = vpack.c.b16 %v1204, %v1203
        %v1216 = vpack.c.b16 %v1206, %v1205
        %v1217 = vpack.c.b16 %v1208, %v1207
        %v1218 = vpack.c.b16 %v1210, %v1209
        %1227 = vmatprep.subr.bf16.mxu0 0
        %1228 = vmatpush1.bf16.msra.mxu0 %v1218
        %1229 = vmatprep.subr.bf16.mxu0 0
        %1230 = vmatpush1.bf16.msra.mxu0 %v1217
        %1231 = vmatprep.subr.bf16.mxu0 0
        %1232 = vmatpush1.bf16.msra.mxu0 %v1216
        %1233 = vmatprep.subr.bf16.mxu0 0
        %1234 = vmatpush1.bf16.msra.mxu0 %v1215
        %1235 = vmatprep.subr.bf16.mxu0 0
        %1236 = vmatpush1.bf16.msra.mxu0 %v1214
        %1237 = vmatprep.subr.bf16.mxu0 0
        %1238 = vmatpush1.bf16.msra.mxu0 %v1213
        %1239 = vmatprep.subr.bf16.mxu0 0
        %1240 = vmatpush1.bf16.msra.mxu0 %v1212
        %1241 = vmatprep.subr.bf16.mxu0 0
        %1242 = vmatpush1.bf16.msra.mxu0 %v1211
        %1243 = vmatprep.subr.bf16.mxu0 0
        %1244 = vmatpush2.bf16.msra.mxu0 0
        %1245 = vmatprep.subr.bf16.mxu0 0
        %1246 = vmatpush2.bf16.msra.mxu0 0
        %1247 = vmatprep.subr.bf16.mxu0 0
        %1248 = vmatpush2.bf16.msra.mxu0 0
        %1249 = vmatprep.subr.bf16.mxu0 0
        %1250 = vmatpush2.bf16.msra.mxu0 0
        %1251 = vmatprep.subr.bf16.mxu0 0
        %1252 = vmatpush2.bf16.msra.mxu0 0
        %1253 = vmatprep.subr.bf16.mxu0 0
        %1254 = vmatpush2.bf16.msra.mxu0 0
        %1255 = vmatprep.subr.bf16.mxu0 0
        %1256 = vmatpush2.bf16.msra.mxu0 0
        %1257 = vmatprep.subr.bf16.mxu0 0
        %1258 = vmatpush2.bf16.msra.mxu0 0
        %1259 = vmatprep.mubr.bf16.mxu0 0
        %1260 = vmatmul.mubr.bf16.gmra.mxu0 %v1155
        %v1261 = vpop.f32.mrf.mxu0
        %v1262 = vadd.f32 %v1177, %v1261
        %v1263 = vpop.f32.mrf.mxu0
        %v1264 = vpop.f32.mrf.mxu0
        %v1265 = vpop.f32.mrf.mxu0
        %1266 = vdwg.mxu0
        %v1267 = vadd.f32 %v1262, %v667
        %v1268 = vld [vmem:[%s8] sm:$0x1]
        %v1269 = vld [vmem:[%s9] sm:$0x1]
        %1270 = vadd.xlane.f32.xlu0 %v1267
        %v1271 = vpop.xlane.xlu0 %1270
        %v1272 = vmul.f32 %v1271, %v644
        %v1273 = vsub.f32 %v1267, %v1272
        %v1274 = vmul.f32 %v1273, %v1273
        %1275 = vadd.xlane.f32.xlu0 %v1274
        %v1276 = vpop.xlane.xlu0 %1275
        %v1277 = vmul.f32 %v1276, %v644
        %v1278 = vadd.f32 %v1277, 1e-12
        %v1279 = vrsqrt.pop %v1278
        %v1280 = vmul.f32 %v1273, %v1279
        %v1282 = vlaneseq
        %v1283 = vshrl.u32 %v1282, 7
        %v1284 = vsub.s32 0, %v1283
        %v1285 = vrot.slane %v1268, %v1284
        %v1287 = vmul.f32 %v1280, %v1285
        %v1289 = vlaneseq
        %v1290 = vshrl.u32 %v1289, 7
        %v1291 = vsub.s32 0, %v1290
        %v1292 = vrot.slane %v1269, %v1291
        %v1294 = vadd.f32 %v1287, %v1292
        %v1295 = vpack.c.bf16 %v1294, %v1294
        %v1296 = vld [vmem:[%s10] sm:$0xff]
        %v1297 = vld [vmem:[%s10 + $0x8] sm:$0xff]
        %v1298 = vld [vmem:[%s10 + $0x10] sm:$0xff]
        %v1299 = vld [vmem:[%s10 + $0x18] sm:$0xff]
        %v1300 = vld [vmem:[%s10 + $0x20] sm:$0xff]
        %v1301 = vld [vmem:[%s10 + $0x28] sm:$0xff]
        %v1302 = vld [vmem:[%s10 + $0x30] sm:$0xff]
        %v1303 = vld [vmem:[%s10 + $0x38] sm:$0xff]
        %v1304 = vld [vmem:[%s10 + $0x40] sm:$0xff]
        %v1305 = vld [vmem:[%s10 + $0x48] sm:$0xff]
        %v1306 = vld [vmem:[%s10 + $0x50] sm:$0xff]
        %v1307 = vld [vmem:[%s10 + $0x58] sm:$0xff]
        %v1308 = vld [vmem:[%s10 + $0x60] sm:$0xff]
        %v1309 = vld [vmem:[%s10 + $0x68] sm:$0xff]
        %v1310 = vld [vmem:[%s10 + $0x70] sm:$0xff]
        %v1311 = vld [vmem:[%s10 + $0x78] sm:$0xff]
        %v1312 = vld [vmem:[%s11] sm:$0x3]
        %v1314 = vlaneseq
        %v1315 = vshrl.u32 %v1314, 7
        %v1316 = vsub.s32 0, %v1315
        %v1317 = vrot.slane %v1312, %v1316
        %v1318 = vlaneseq
        %v1319 = vshrl.u32 %v1318, 7
        %v1320 = vsub.s32 1, %v1319
        %v1321 = vrot.slane %v1312, %v1320
        %v1340 = vunpack.c.l.b16 %v1296
        %v1341 = vunpack.c.h.b16 %v1296
        %v1342 = vunpack.c.l.b16 %v1297
        %v1343 = vunpack.c.h.b16 %v1297
        %v1344 = vunpack.c.l.b16 %v1298
        %v1345 = vunpack.c.h.b16 %v1298
        %v1346 = vunpack.c.l.b16 %v1299
        %v1347 = vunpack.c.h.b16 %v1299
        %v1348 = vunpack.c.l.b16 %v1300
        %v1349 = vunpack.c.h.b16 %v1300
        %v1350 = vunpack.c.l.b16 %v1301
        %v1351 = vunpack.c.h.b16 %v1301
        %v1352 = vunpack.c.l.b16 %v1302
        %v1353 = vunpack.c.h.b16 %v1302
        %v1354 = vunpack.c.l.b16 %v1303
        %v1355 = vunpack.c.h.b16 %v1303
        %v1356 = vunpack.c.l.b16 %v1304
        %v1357 = vunpack.c.h.b16 %v1304
        %v1358 = vunpack.c.l.b16 %v1305
        %v1359 = vunpack.c.h.b16 %v1305
        %v1360 = vunpack.c.l.b16 %v1306
        %v1361 = vunpack.c.h.b16 %v1306
        %v1362 = vunpack.c.l.b16 %v1307
        %v1363 = vunpack.c.h.b16 %v1307
        %v1364 = vunpack.c.l.b16 %v1308
        %v1365 = vunpack.c.h.b16 %v1308
        %v1366 = vunpack.c.l.b16 %v1309
        %v1367 = vunpack.c.h.b16 %v1309
        %v1368 = vunpack.c.l.b16 %v1310
        %v1369 = vunpack.c.h.b16 %v1310
        %v1370 = vunpack.c.l.b16 %v1311
        %v1371 = vunpack.c.h.b16 %v1311
        %v1372 = vpack.c.b16 %v1342, %v1340
        %v1373 = vpack.c.b16 %v1343, %v1341
        %v1374 = vpack.c.b16 %v1346, %v1344
        %v1375 = vpack.c.b16 %v1347, %v1345
        %v1376 = vpack.c.b16 %v1350, %v1348
        %v1377 = vpack.c.b16 %v1351, %v1349
        %v1378 = vpack.c.b16 %v1354, %v1352
        %v1379 = vpack.c.b16 %v1355, %v1353
        %v1380 = vpack.c.b16 %v1358, %v1356
        %v1381 = vpack.c.b16 %v1359, %v1357
        %v1382 = vpack.c.b16 %v1362, %v1360
        %v1383 = vpack.c.b16 %v1363, %v1361
        %v1384 = vpack.c.b16 %v1366, %v1364
        %v1385 = vpack.c.b16 %v1367, %v1365
        %v1386 = vpack.c.b16 %v1370, %v1368
        %v1387 = vpack.c.b16 %v1371, %v1369
        %1404 = vmatprep.subr.bf16.mxu0 %v1387
        %1405 = vmatpush1.bf16.msra.mxu0 %v1386
        %1406 = vmatprep.subr.bf16.mxu0 %v1385
        %1407 = vmatpush1.bf16.msra.mxu0 %v1384
        %1408 = vmatprep.subr.bf16.mxu0 %v1383
        %1409 = vmatpush1.bf16.msra.mxu0 %v1382
        %1410 = vmatprep.subr.bf16.mxu0 %v1381
        %1411 = vmatpush1.bf16.msra.mxu0 %v1380
        %1412 = vmatprep.subr.bf16.mxu0 %v1379
        %1413 = vmatpush1.bf16.msra.mxu0 %v1378
        %1414 = vmatprep.subr.bf16.mxu0 %v1377
        %1415 = vmatpush1.bf16.msra.mxu0 %v1376
        %1416 = vmatprep.subr.bf16.mxu0 %v1375
        %1417 = vmatpush1.bf16.msra.mxu0 %v1374
        %1418 = vmatprep.subr.bf16.mxu0 %v1373
        %1419 = vmatpush1.bf16.msra.mxu0 %v1372
        %1420 = vmatprep.subr.bf16.mxu0 0
        %1421 = vmatpush2.bf16.msra.mxu0 0
        %1422 = vmatprep.subr.bf16.mxu0 0
        %1423 = vmatpush2.bf16.msra.mxu0 0
        %1424 = vmatprep.subr.bf16.mxu0 0
        %1425 = vmatpush2.bf16.msra.mxu0 0
        %1426 = vmatprep.subr.bf16.mxu0 0
        %1427 = vmatpush2.bf16.msra.mxu0 0
        %1428 = vmatprep.subr.bf16.mxu0 0
        %1429 = vmatpush2.bf16.msra.mxu0 0
        %1430 = vmatprep.subr.bf16.mxu0 0
        %1431 = vmatpush2.bf16.msra.mxu0 0
        %1432 = vmatprep.subr.bf16.mxu0 0
        %1433 = vmatpush2.bf16.msra.mxu0 0
        %1434 = vmatprep.subr.bf16.mxu0 0
        %1435 = vmatpush2.bf16.msra.mxu0 0
        %1436 = vmatprep.mubr.bf16.mxu0 0
        %1437 = vmatmul.mubr.bf16.gmra.mxu0 %v1295
        %v1438 = vpop.f32.mrf.mxu0
        %v1439 = vadd.f32 %v1317, %v1438
        %v1440 = vpop.f32.mrf.mxu0
        %v1441 = vadd.f32 %v1321, %v1440
        %v1442 = vpop.f32.mrf.mxu0
        %v1443 = vpop.f32.mrf.mxu0
        %1444 = vdwg.mxu0
        %v1445 = vmul.f32 %v1439, 0.5
        %v1446 = vmul.f32 %v1441, 0.5
        %v1447 = vmul.f32 %v1439, 0.044715
        %v1448 = vmul.f32 %v1441, 0.044715
        %v1449 = vmul.f32 %v1447, %v1439
        %v1450 = vmul.f32 %v1448, %v1441
        %v1451 = vmul.f32 %v1449, %v1439
        %v1452 = vmul.f32 %v1450, %v1441
        %v1453 = vadd.f32 %v1439, %v1451
        %v1454 = vadd.f32 %v1441, %v1452
        %v1455 = vmul.f32 %v1453, 0.7978846
        %v1456 = vmul.f32 %v1454, 0.7978846
        %v1457 = vtanh.pop %v1455
        %v1458 = vtanh.pop %v1456
        %v1459 = vadd.f32 %v1457, 1.0
        %v1460 = vadd.f32 %v1458, 1.0
        %v1461 = vmul.f32 %v1445, %v1459
        %v1462 = vmul.f32 %v1446, %v1460
        %v1463 = vpack.c.bf16 %v1461, %v1461
        %v1464 = vpack.c.bf16 %v1462, %v1462
        %v1465 = vld [vmem:[%s12] sm:$0xf]
        %v1466 = vld [vmem:[%s12 + $0x4] sm:$0xf]
        %v1467 = vld [vmem:[%s12 + $0x8] sm:$0xf]
        %v1468 = vld [vmem:[%s12 + $0xc] sm:$0xf]
        %v1469 = vld [vmem:[%s12 + $0x10] sm:$0xf]
        %v1470 = vld [vmem:[%s12 + $0x14] sm:$0xf]
        %v1471 = vld [vmem:[%s12 + $0x18] sm:$0xf]
        %v1472 = vld [vmem:[%s12 + $0x1c] sm:$0xf]
        %v1473 = vld [vmem:[%s12 + $0x20] sm:$0xf]
        %v1474 = vld [vmem:[%s12 + $0x24] sm:$0xf]
        %v1475 = vld [vmem:[%s12 + $0x28] sm:$0xf]
        %v1476 = vld [vmem:[%s12 + $0x2c] sm:$0xf]
        %v1477 = vld [vmem:[%s12 + $0x30] sm:$0xf]
        %v1478 = vld [vmem:[%s12 + $0x34] sm:$0xf]
        %v1479 = vld [vmem:[%s12 + $0x38] sm:$0xf]
        %v1480 = vld [vmem:[%s12 + $0x3c] sm:$0xf]
        %v1481 = vld [vmem:[%s12 + $0x40] sm:$0xf]
        %v1482 = vld [vmem:[%s12 + $0x44] sm:$0xf]
        %v1483 = vld [vmem:[%s12 + $0x48] sm:$0xf]
        %v1484 = vld [vmem:[%s12 + $0x4c] sm:$0xf]
        %v1485 = vld [vmem:[%s12 + $0x50] sm:$0xf]
        %v1486 = vld [vmem:[%s12 + $0x54] sm:$0xf]
        %v1487 = vld [vmem:[%s12 + $0x58] sm:$0xf]
        %v1488 = vld [vmem:[%s12 + $0x5c] sm:$0xf]
        %v1489 = vld [vmem:[%s12 + $0x60] sm:$0xf]
        %v1490 = vld [vmem:[%s12 + $0x64] sm:$0xf]
        %v1491 = vld [vmem:[%s12 + $0x68] sm:$0xf]
        %v1492 = vld [vmem:[%s12 + $0x6c] sm:$0xf]
        %v1493 = vld [vmem:[%s12 + $0x70] sm:$0xf]
        %v1494 = vld [vmem:[%s12 + $0x74] sm:$0xf]
        %v1495 = vld [vmem:[%s12 + $0x78] sm:$0xf]
        %v1496 = vld [vmem:[%s12 + $0x7c] sm:$0xf]
        %v1497 = vld [vmem:[%s13] sm:$0x1]
        %v1499 = vlaneseq
        %v1500 = vshrl.u32 %v1499, 7
        %v1501 = vsub.s32 0, %v1500
        %v1502 = vrot.slane %v1497, %v1501
        %v1536 = vunpack.c.l.b16 %v1465
        %v1537 = vunpack.c.l.b16 %v1466
        %v1538 = vunpack.c.l.b16 %v1467
        %v1539 = vunpack.c.l.b16 %v1468
        %v1540 = vunpack.c.l.b16 %v1469
        %v1541 = vunpack.c.l.b16 %v1470
        %v1542 = vunpack.c.l.b16 %v1471
        %v1543 = vunpack.c.l.b16 %v1472
        %v1544 = vunpack.c.l.b16 %v1473
        %v1545 = vunpack.c.l.b16 %v1474
        %v1546 = vunpack.c.l.b16 %v1475
        %v1547 = vunpack.c.l.b16 %v1476
        %v1548 = vunpack.c.l.b16 %v1477
        %v1549 = vunpack.c.l.b16 %v1478
        %v1550 = vunpack.c.l.b16 %v1479
        %v1551 = vunpack.c.l.b16 %v1480
        %v1552 = vunpack.c.l.b16 %v1481
        %v1553 = vunpack.c.l.b16 %v1482
        %v1554 = vunpack.c.l.b16 %v1483
        %v1555 = vunpack.c.l.b16 %v1484
        %v1556 = vunpack.c.l.b16 %v1485
        %v1557 = vunpack.c.l.b16 %v1486
        %v1558 = vunpack.c.l.b16 %v1487
        %v1559 = vunpack.c.l.b16 %v1488
        %v1560 = vunpack.c.l.b16 %v1489
        %v1561 = vunpack.c.l.b16 %v1490
        %v1562 = vunpack.c.l.b16 %v1491
        %v1563 = vunpack.c.l.b16 %v1492
        %v1564 = vunpack.c.l.b16 %v1493
        %v1565 = vunpack.c.l.b16 %v1494
        %v1566 = vunpack.c.l.b16 %v1495
        %v1567 = vunpack.c.l.b16 %v1496
        %v1568 = vpack.c.b16 %v1537, %v1536
        %v1569 = vpack.c.b16 %v1539, %v1538
        %v1570 = vpack.c.b16 %v1541, %v1540
        %v1571 = vpack.c.b16 %v1543, %v1542
        %v1572 = vpack.c.b16 %v1545, %v1544
        %v1573 = vpack.c.b16 %v1547, %v1546
        %v1574 = vpack.c.b16 %v1549, %v1548
        %v1575 = vpack.c.b16 %v1551, %v1550
        %v1576 = vpack.c.b16 %v1553, %v1552
        %v1577 = vpack.c.b16 %v1555, %v1554
        %v1578 = vpack.c.b16 %v1557, %v1556
        %v1579 = vpack.c.b16 %v1559, %v1558
        %v1580 = vpack.c.b16 %v1561, %v1560
        %v1581 = vpack.c.b16 %v1563, %v1562
        %v1582 = vpack.c.b16 %v1565, %v1564
        %v1583 = vpack.c.b16 %v1567, %v1566
        %1600 = vmatprep.subr.bf16.mxu0 0
        %1601 = vmatpush1.bf16.msra.mxu0 %v1575
        %1602 = vmatprep.subr.bf16.mxu0 0
        %1603 = vmatpush1.bf16.msra.mxu0 %v1574
        %1604 = vmatprep.subr.bf16.mxu0 0
        %1605 = vmatpush1.bf16.msra.mxu0 %v1573
        %1606 = vmatprep.subr.bf16.mxu0 0
        %1607 = vmatpush1.bf16.msra.mxu0 %v1572
        %1608 = vmatprep.subr.bf16.mxu0 0
        %1609 = vmatpush1.bf16.msra.mxu0 %v1571
        %1610 = vmatprep.subr.bf16.mxu0 0
        %1611 = vmatpush1.bf16.msra.mxu0 %v1570
        %1612 = vmatprep.subr.bf16.mxu0 0
        %1613 = vmatpush1.bf16.msra.mxu0 %v1569
        %1614 = vmatprep.subr.bf16.mxu0 0
        %1615 = vmatpush1.bf16.msra.mxu0 %v1568
        %1616 = vmatprep.subr.bf16.mxu0 0
        %1617 = vmatpush2.bf16.msra.mxu0 %v1583
        %1618 = vmatprep.subr.bf16.mxu0 0
        %1619 = vmatpush2.bf16.msra.mxu0 %v1582
        %1620 = vmatprep.subr.bf16.mxu0 0
        %1621 = vmatpush2.bf16.msra.mxu0 %v1581
        %1622 = vmatprep.subr.bf16.mxu0 0
        %1623 = vmatpush2.bf16.msra.mxu0 %v1580
        %1624 = vmatprep.subr.bf16.mxu0 0
        %1625 = vmatpush2.bf16.msra.mxu0 %v1579
        %1626 = vmatprep.subr.bf16.mxu0 0
        %1627 = vmatpush2.bf16.msra.mxu0 %v1578
        %1628 = vmatprep.subr.bf16.mxu0 0
        %1629 = vmatpush2.bf16.msra.mxu0 %v1577
        %1630 = vmatprep.subr.bf16.mxu0 0
        %1631 = vmatpush2.bf16.msra.mxu0 %v1576
        %1632 = vmatprep.mubr.bf16.mxu0 %v1464
        %1633 = vmatmul.mubr.bf16.gmra.mxu0 %v1463
        %v1634 = vpop.f32.mrf.mxu0
        %v1635 = vadd.f32 %v1502, %v1634
        %v1636 = vpop.f32.mrf.mxu0
        %v1637 = vpop.f32.mrf.mxu0
        %v1638 = vpop.f32.mrf.mxu0
        %1639 = vdwg.mxu0
        %v1640 = vadd.f32 %v1635, %v1294
        %v1641 = vld [vmem:[%s14] sm:$0x1]
        %v1642 = vld [vmem:[%s15] sm:$0x1]
        %1643 = vadd.xlane.f32.xlu0 %v1640
        %v1644 = vpop.xlane.xlu0 %1643
        %v1645 = vmul.f32 %v1644, %v644
        %v1646 = vsub.f32 %v1640, %v1645
        %v1647 = vmul.f32 %v1646, %v1646
        %1648 = vadd.xlane.f32.xlu0 %v1647
        %v1649 = vpop.xlane.xlu0 %1648
        %v1650 = vmul.f32 %v1649, %v644
        %v1651 = vadd.f32 %v1650, 1e-12
        %v1652 = vrsqrt.pop %v1651
        %v1653 = vmul.f32 %v1646, %v1652
        %v1655 = vlaneseq
        %v1656 = vshrl.u32 %v1655, 7
        %v1657 = vsub.s32 0, %v1656
        %v1658 = vrot.slane %v1641, %v1657
        %v1660 = vmul.f32 %v1653, %v1658
        %v1662 = vlaneseq
        %v1663 = vshrl.u32 %v1662, 7
        %v1664 = vsub.s32 0, %v1663
        %v1665 = vrot.slane %v1642, %v1664
        %v1667 = vadd.f32 %v1660, %v1665
        %v1668 = vpack.c.bf16 %v1667, %v1667
        %v1669 = vld [vmem:[%s16] sm:$0xf]
        %v1670 = vld [vmem:[%s16 + $0x4] sm:$0xf]
        %v1671 = vld [vmem:[%s16 + $0x8] sm:$0xf]
        %v1672 = vld [vmem:[%s16 + $0xc] sm:$0xf]
        %v1673 = vld [vmem:[%s16 + $0x10] sm:$0xf]
        %v1674 = vld [vmem:[%s16 + $0x14] sm:$0xf]
        %v1675 = vld [vmem:[%s16 + $0x18] sm:$0xf]
        %v1676 = vld [vmem:[%s16 + $0x1c] sm:$0xf]
        %v1677 = vld [vmem:[%s16 + $0x20] sm:$0xf]
        %v1678 = vld [vmem:[%s16 + $0x24] sm:$0xf]
        %v1679 = vld [vmem:[%s16 + $0x28] sm:$0xf]
        %v1680 = vld [vmem:[%s16 + $0x2c] sm:$0xf]
        %v1681 = vld [vmem:[%s16 + $0x30] sm:$0xf]
        %v1682 = vld [vmem:[%s16 + $0x34] sm:$0xf]
        %v1683 = vld [vmem:[%s16 + $0x38] sm:$0xf]
        %v1684 = vld [vmem:[%s16 + $0x3c] sm:$0xf]
        %v1685 = vld [vmem:[%s17] sm:$0x1]
        %v1702 = vunpack.c.l.b16 %v1669
        %v1703 = vunpack.c.l.b16 %v1670
        %v1704 = vunpack.c.l.b16 %v1671
        %v1705 = vunpack.c.l.b16 %v1672
        %v1706 = vunpack.c.l.b16 %v1673
        %v1707 = vunpack.c.l.b16 %v1674
        %v1708 = vunpack.c.l.b16 %v1675
        %v1709 = vunpack.c.l.b16 %v1676
        %v1710 = vunpack.c.l.b16 %v1677
        %v1711 = vunpack.c.l.b16 %v1678
        %v1712 = vunpack.c.l.b16 %v1679
        %v1713 = vunpack.c.l.b16 %v1680
        %v1714 = vunpack.c.l.b16 %v1681
        %v1715 = vunpack.c.l.b16 %v1682
        %v1716 = vunpack.c.l.b16 %v1683
        %v1717 = vunpack.c.l.b16 %v1684
        %v1718 = vpack.c.b16 %v1703, %v1702
        %v1719 = vpack.c.b16 %v1705, %v1704
        %v1720 = vpack.c.b16 %v1707, %v1706
        %v1721 = vpack.c.b16 %v1709, %v1708
        %v1722 = vpack.c.b16 %v1711, %v1710
        %v1723 = vpack.c.b16 %v1713, %v1712
        %v1724 = vpack.c.b16 %v1715, %v1714
        %v1725 = vpack.c.b16 %v1717, %v1716
        %1734 = vmatprep.subr.bf16.mxu0 0
        %1735 = vmatpush1.bf16.msra.mxu0 %v1725
        %1736 = vmatprep.subr.bf16.mxu0 0
        %1737 = vmatpush1.bf16.msra.mxu0 %v1724
        %1738 = vmatprep.subr.bf16.mxu0 0
        %1739 = vmatpush1.bf16.msra.mxu0 %v1723
        %1740 = vmatprep.subr.bf16.mxu0 0
        %1741 = vmatpush1.bf16.msra.mxu0 %v1722
        %1742 = vmatprep.subr.bf16.mxu0 0
        %1743 = vmatpush1.bf16.msra.mxu0 %v1721
        %1744 = vmatprep.subr.bf16.mxu0 0
        %1745 = vmatpush1.bf16.msra.mxu0 %v1720
        %1746 = vmatprep.subr.bf16.mxu0 0
        %1747 = vmatpush1.bf16.msra.mxu0 %v1719
        %1748 = vmatprep.subr.bf16.mxu0 0
        %1749 = vmatpush1.bf16.msra.mxu0 %v1718
        %1750 = vmatprep.subr.bf16.mxu0 0
        %1751 = vmatpush2.bf16.msra.mxu0 0
        %1752 = vmatprep.subr.bf16.mxu0 0
        %1753 = vmatpush2.bf16.msra.mxu0 0
        %1754 = vmatprep.subr.bf16.mxu0 0
        %1755 = vmatpush2.bf16.msra.mxu0 0
        %1756 = vmatprep.subr.bf16.mxu0 0
        %1757 = vmatpush2.bf16.msra.mxu0 0
        %1758 = vmatprep.subr.bf16.mxu0 0
        %1759 = vmatpush2.bf16.msra.mxu0 0
        %1760 = vmatprep.subr.bf16.mxu0 0
        %1761 = vmatpush2.bf16.msra.mxu0 0
        %1762 = vmatprep.subr.bf16.mxu0 0
        %1763 = vmatpush2.bf16.msra.mxu0 0
        %1764 = vmatprep.subr.bf16.mxu0 0
        %1765 = vmatpush2.bf16.msra.mxu0 0
        %1766 = vmatprep.mubr.bf16.mxu0 0
        %1767 = vmatmul.mubr.bf16.gmra.mxu0 %v1668
        %v1768 = vpop.f32.mrf.mxu0
        %v1769 = vadd.f32 %v1685, %v1768
        %v1770 = vpop.f32.mrf.mxu0
        %v1771 = vpop.f32.mrf.mxu0
        %v1772 = vpop.f32.mrf.mxu0
        %1773 = vdwg.mxu0
        %v1774 = vtanh.pop %v1769
        %v1775 = vpack.c.bf16 %v1774, %v1774
        %v1776 = vld [vmem:[%s18] sm:$0xf]
        %v1777 = vld [vmem:[%s18 + $0x4] sm:$0xf]
        %v1778 = vld [vmem:[%s18 + $0x8] sm:$0xf]
        %v1779 = vld [vmem:[%s18 + $0xc] sm:$0xf]
        %v1780 = vld [vmem:[%s18 + $0x10] sm:$0xf]
        %v1781 = vld [vmem:[%s18 + $0x14] sm:$0xf]
        %v1782 = vld [vmem:[%s18 + $0x18] sm:$0xf]
        %v1783 = vld [vmem:[%s18 + $0x1c] sm:$0xf]
        %v1784 = vld [vmem:[%s18 + $0x20] sm:$0xf]
        %v1785 = vld [vmem:[%s18 + $0x24] sm:$0xf]
        %v1786 = vld [vmem:[%s18 + $0x28] sm:$0xf]
        %v1787 = vld [vmem:[%s18 + $0x2c] sm:$0xf]
        %v1788 = vld [vmem:[%s18 + $0x30] sm:$0xf]
        %v1789 = vld [vmem:[%s18 + $0x34] sm:$0xf]
        %v1790 = vld [vmem:[%s18 + $0x38] sm:$0xf]
        %v1791 = vld [vmem:[%s18 + $0x3c] sm:$0xf]
        %v1792 = vld [vmem:[%s19] sm:$0x1]
        %v1809 = vunpack.c.l.b16 %v1776
        %v1810 = vunpack.c.l.b16 %v1777
        %v1811 = vunpack.c.l.b16 %v1778
        %v1812 = vunpack.c.l.b16 %v1779
        %v1813 = vunpack.c.l.b16 %v1780
        %v1814 = vunpack.c.l.b16 %v1781
        %v1815 = vunpack.c.l.b16 %v1782
        %v1816 = vunpack.c.l.b16 %v1783
        %v1817 = vunpack.c.l.b16 %v1784
        %v1818 = vunpack.c.l.b16 %v1785
        %v1819 = vunpack.c.l.b16 %v1786
        %v1820 = vunpack.c.l.b16 %v1787
        %v1821 = vunpack.c.l.b16 %v1788
        %v1822 = vunpack.c.l.b16 %v1789
        %v1823 = vunpack.c.l.b16 %v1790
        %v1824 = vunpack.c.l.b16 %v1791
        %v1825 = vpack.c.b16 %v1810, %v1809
        %v1826 = vpack.c.b16 %v1812, %v1811
        %v1827 = vpack.c.b16 %v1814, %v1813
        %v1828 = vpack.c.b16 %v1816, %v1815
        %v1829 = vpack.c.b16 %v1818, %v1817
        %v1830 = vpack.c.b16 %v1820, %v1819
        %v1831 = vpack.c.b16 %v1822, %v1821
        %v1832 = vpack.c.b16 %v1824, %v1823
        %1841 = vmatprep.subr.bf16.mxu0 0
        %1842 = vmatpush1.bf16.msra.mxu0 %v1832
        %1843 = vmatprep.subr.bf16.mxu0 0
        %1844 = vmatpush1.bf16.msra.mxu0 %v1831
        %1845 = vmatprep.subr.bf16.mxu0 0
        %1846 = vmatpush1.bf16.msra.mxu0 %v1830
        %1847 = vmatprep.subr.bf16.mxu0 0
        %1848 = vmatpush1.bf16.msra.mxu0 %v1829
        %1849 = vmatprep.subr.bf16.mxu0 0
        %1850 = vmatpush1.bf16.msra.mxu0 %v1828
        %1851 = vmatprep.subr.bf16.mxu0 0
        %1852 = vmatpush1.bf16.msra.mxu0 %v1827
        %1853 = vmatprep.subr.bf16.mxu0 0
        %1854 = vmatpush1.bf16.msra.mxu0 %v1826
        %1855 = vmatprep.subr.bf16.mxu0 0
        %1856 = vmatpush1.bf16.msra.mxu0 %v1825
        %1857 = vmatprep.subr.bf16.mxu0 0
        %1858 = vmatpush2.bf16.msra.mxu0 0
        %1859 = vmatprep.subr.bf16.mxu0 0
        %1860 = vmatpush2.bf16.msra.mxu0 0
        %1861 = vmatprep.subr.bf16.mxu0 0
        %1862 = vmatpush2.bf16.msra.mxu0 0
        %1863 = vmatprep.subr.bf16.mxu0 0
        %1864 = vmatpush2.bf16.msra.mxu0 0
        %1865 = vmatprep.subr.bf16.mxu0 0
        %1866 = vmatpush2.bf16.msra.mxu0 0
        %1867 = vmatprep.subr.bf16.mxu0 0
        %1868 = vmatpush2.bf16.msra.mxu0 0
        %1869 = vmatprep.subr.bf16.mxu0 0
        %1870 = vmatpush2.bf16.msra.mxu0 0
        %1871 = vmatprep.subr.bf16.mxu0 0
        %1872 = vmatpush2.bf16.msra.mxu0 0
        %1873 = vmatprep.mubr.bf16.mxu0 0
        %1874 = vmatmul.mubr.bf16.gmra.mxu0 %v1775
        %v1875 = vpop.f32.mrf.mxu0
        %v1876 = vadd.f32 %v1792, %v1875
        %v1877 = vpop.f32.mrf.mxu0
        %v1878 = vpop.f32.mrf.mxu0
        %v1879 = vpop.f32.mrf.mxu0
        %1880 = vdwg.mxu0
        %1881 = vst [vmem:[%s630] sm:$0x1] %v1876
        %s1882 = sand.u32 %s472, 1
        %s1883 = scalar_lea.sflag [#allocation3], %s1882
        %s1884 = sand.u32 %s472, 1
        %s1885 = scalar_lea.vmem [#allocation2], %s1884
        // Predicated region
        $region101: #{classifier_net_forward.1} parent=99 // pred_check
          %p1886 = pneg %p482
        $region102: #{classifier_net_forward.1} parent=99 // pred_check_branch
          %1888 = sbr.rel (%p1886) target = $region104
        $region103: #{classifier_net_forward.1} parent=99 // pred_region
          %s1890 = ssub.s32 16, 16
          %1891 = vsyncadd %s1883, %s1890
          %s1892 = smul.addr %s34, 16
          %s1893 = scalar_lea.hbm %s20, %s1892
          %s1895 = sshll.u32 %s1885, 4
          %s1896 = int_to_ptr.vmem [resolvable:$true] %s1895
          %1898 = dma.vmem_to_hbm [thread:$0]  %s1896, 16, %s1893, %s1883
        $region104: #{classifier_net_forward.1} parent=99 // pred_fallthru
          _
      $region100: #{classifier_net_forward.1} parent=5 // pred_fallthru
        _
      %p1899 = scmp.le.s32.totalorder 2, %s29
      // Predicated region
      $region105: #{classifier_net_forward.1} parent=5 // pred_check
        %p1900 = pneg %p1899
      $region106: #{classifier_net_forward.1} parent=5 // pred_check_branch
        %1902 = sbr.rel (%p1900) target = $region108
      $region107: #{classifier_net_forward.1} parent=5 // pred_region
        %s1903 = ssub.s32 %s29, 2
        // Predicated region
        $region109: #{classifier_net_forward.1} parent=107 // pred_check
          %p1904 = pneg %p488
        $region110: #{classifier_net_forward.1} parent=107 // pred_check_branch
          %1906 = sbr.rel (%p1904) target = $region112
        $region111: #{classifier_net_forward.1} parent=107 // pred_region
          %s1907 = sand.u32 %s473, 1
          %s1908 = scalar_lea.sflag [#allocation3], %s1907
          %s1909 = sand.u32 %s473, 1
          %s1910 = scalar_lea.vmem [#allocation2], %s1909
          %1911 = dma.done %s1908, 16
        $region112: #{classifier_net_forward.1} parent=107 // pred_fallthru
          _
      $region108: #{classifier_net_forward.1} parent=5 // pred_fallthru
        _
    $region6: #{classifier_net_forward.1} parent=1 // loop_footer
      %s33 = sadd.s32 1, %s29
    $region7: #{classifier_net_forward.1} parent=1 // loop_footer_branch
      %28 = sbr.rel target = $region3
    $region8: #{classifier_net_forward.1} parent=1 // loop_exit
      _
    %1912 = vsyncpa [#allocation3], 1
    %s1913 = scalar_lea.sflag [#allocation3], 1
    %1914 = vsyncpa %s1913, 1

</llo_original>
